<compile_context>
chip_gen: v7x
topology: tpu7x:2x2x1
jax: 0.10.0
libtpu: 0.0.40
codegen_flags: <defaults>
</compile_context>

<pallas_src>
import functools

import jax
import jax.numpy as jnp
from jax.experimental import pallas as pl
from jax.experimental.pallas import tpu as pltpu


def _round_up(n, m):
    return ((n + m - 1) // m) * m


# ----------------------------- fused kernel --------------------------------
#
# In-kernel activation layouts (tb = batch tile, multiple of 8):
#   x    : [28, tb, 28]                       (H, B, W)
#   conv1: rows (oh, b), 256 lanes = [even ow | odd ow], lane-in-block = w1*6 + oc
#          (72 valid per block, rest exact zeros)
#   pool1: [12, tb, 128], valid lanes l = w1*6 + ic     (l >= 72 are zeros)
#   conv2: rows (oh2, b), 256 lanes = [even ow2 | odd ow2], lane = w2*16 + oc2
#   pool2: [4, tb, 128], valid lanes l = w2*16 + oc2    (l >= 64 are zeros)
#   fc   : [tb, 120] -> [tb, 84] -> [tb, 128] (cols 10..127 are zero padding)

def _lenet_kernel(x_ref, k1_ref, b1_ref, k2_ref, b2_ref,
                  f1w_ref, f1b_ref, f2w_ref, f2b_ref, f3w_ref, f3b_ref,
                  o_ref, *, tb):
    f32 = jnp.float32
    bf16 = jnp.bfloat16
    x = x_ref[...]                                            # [28, tb, 28] f32

    # ---- conv1 (1->6, 5x5 valid): one banded matmul, K = 5 taps x 28 widths ----
    l1 = jnp.concatenate(
        [x[i:i + 24].reshape(24 * tb, 28) for i in range(5)], axis=-1)
    acc1 = jnp.dot(l1.astype(bf16), k1_ref[...], preferred_element_type=f32)
    y1 = jnp.maximum(acc1 + b1_ref[...], 0.0)                 # [24*tb, 256]

    # ---- maxpool 2x2: height = row-pair max, width = even/odd half-lane max ----
    r1 = y1.reshape(12, 2, tb, 256)
    p1 = jnp.maximum(r1[:, 0], r1[:, 1])                      # [12, tb, 256]
    h1 = jnp.maximum(p1[..., :128], p1[..., 128:])            # [12, tb, 128]

    # ---- conv2 (6->16, 5x5): one banded matmul, K = 5 taps x 128 lanes ----
    # (h1 lanes >= 72 are zeros and also hit zero rows of K2.)
    l2 = jnp.concatenate(
        [h1[i:i + 8].reshape(8 * tb, 128) for i in range(5)], axis=-1)
    acc2 = jnp.dot(l2.astype(bf16), k2_ref[...], preferred_element_type=f32)
    y2 = jnp.maximum(acc2 + b2_ref[...], 0.0)                 # [8*tb, 256]

    # ---- maxpool 2x2 ----
    r2 = y2.reshape(4, 2, tb, 256)
    p2 = jnp.maximum(r2[:, 0], r2[:, 1])                      # [4, tb, 256]
    h2 = jnp.maximum(p2[..., :128], p2[..., 128:])            # [4, tb, 128]

    # ---- fc1 (256 valid of 512 -> 120): single dot over the 4 pooled rows ----
    lf = jnp.concatenate([h2[0], h2[1], h2[2], h2[3]], axis=-1)      # [tb, 512]
    f1 = jnp.maximum(jnp.dot(lf.astype(bf16), f1w_ref[...],
                             preferred_element_type=f32) + f1b_ref[...], 0.0)

    # ---- fc2 (120->84) + ReLU ----
    f2 = jnp.maximum(jnp.dot(f1.astype(bf16), f2w_ref[...],
                             preferred_element_type=f32) + f2b_ref[...], 0.0)

    # ---- fc3 (84->10, zero-padded to 128 lanes for an unmasked store) ----
    o_ref[...] = (jnp.dot(f2.astype(bf16), f3w_ref[...],
                          preferred_element_type=f32) + f3b_ref[...]
                  ).astype(o_ref.dtype)


# ----------------------------- wrapper --------------------------------------

def net_forward(x, p, *, tb=None):
    """x: NCHW [B, 1, 28, 28] -> logits [B, 10] (matches the PyTorch Net)."""
    B = x.shape[0]
    assert x.shape[1:] == (1, 28, 28), x.shape
    if tb is None:
        Br = _round_up(B, 8)
        if Br <= 8:
            tb = 8
        else:
            # >= 2 grid steps when possible (v7x dual-TC sharding); tb cap keeps
            # per-step VMEM ~10 MB so it fits v7x's 64 MiB budget with headroom.
            tb = min(128, _round_up((Br + 1) // 2, 8))
    Bp = _round_up(B, tb)

    f32, bf16 = jnp.float32, jnp.bfloat16

    # Input: NCHW -> [H, B, W] (batch on sublanes), pad batch to a tile multiple.
    # TODO(synk): this small layout pass could be fused into the pallas_call via
    # allow_input_fusion; kept as a plain XLA transpose for robustness.
    xhbw = jnp.transpose(x[:, 0, :, :], (1, 0, 2)).astype(f32)        # [28, B, 28]
    if Bp != B:
        xhbw = jnp.pad(xhbw, ((0, 0), (0, Bp - B), (0, 0)))

    # ---- conv1 weights: K1[i*28+w, par*128 + w1*6+oc] = w1[oc,0,i, w-(2*w1+par)] --
    w1 = p["conv1_w"].astype(f32)                                     # [6,1,5,5]
    w_i = jnp.arange(28)[:, None, None]
    wo_i = jnp.arange(12)[None, :, None]
    kw_i = jnp.arange(5)[None, None, :]

    def conv1_block(par):
        sel = (w_i == 2 * wo_i + par + kw_i).astype(f32)              # [28,12,5]
        blk = jnp.einsum("wok,cik->iwoc", sel, w1[:, 0])              # [5,28,12,6]
        return jnp.pad(blk.reshape(5, 28, 72), ((0, 0), (0, 0), (0, 56)))

    K1 = jnp.concatenate([conv1_block(0), conv1_block(1)], axis=-1)   # [5,28,256]
    K1 = K1.reshape(140, 256).astype(bf16)
    b1h = jnp.pad(jnp.tile(p["conv1_b"].astype(f32), 12), (0, 56))    # [128]
    b1v = jnp.concatenate([b1h, b1h])[None, :]                        # [1,256]

    # ---- conv2 weights: K2[i*128 + w1*6+ic, par*128 + w2*16+oc2] (zero junk rows) -
    w2 = p["conv2_w"].astype(f32)                                     # [16,6,5,5]
    w1_i = jnp.arange(12)[:, None, None]
    w2_i = jnp.arange(4)[None, :, None]

    def conv2_block(par):
        sel = (w1_i == 2 * w2_i + par + kw_i).astype(f32)             # [12,4,5]
        blk = jnp.einsum("wuk,cdik->iwduc", sel, w2)                  # [5,12,6,4,16]
        return jnp.pad(blk.reshape(5, 72, 64), ((0, 0), (0, 56), (0, 64)))

    K2 = jnp.concatenate([conv2_block(0), conv2_block(1)], axis=-1)   # [5,128,256]
    K2 = K2.reshape(640, 256).astype(bf16)
    b2h = jnp.pad(jnp.tile(p["conv2_b"].astype(f32), 4), (0, 64))     # [128]
    b2v = jnp.concatenate([b2h, b2h])[None, :]                        # [1,256]

    # ---- fc1 weight permuted to the in-kernel (h, w2*16+oc2) layout -------------
    # (preserves PyTorch's NCHW .view(-1, 16*4*4) flatten semantics exactly)
    F1 = p["fc1_w"].astype(f32).reshape(16, 4, 4, 120)                # [c,h,w,n]
    F1 = jnp.transpose(F1, (1, 2, 0, 3)).reshape(4, 64, 120)          # [h, w*16+c, n]
    F1 = jnp.pad(F1, ((0, 0), (0, 64), (0, 0))).reshape(512, 120).astype(bf16)
    f1b = p["fc1_b"].astype(f32)[None, :]                             # [1,120]
    f2w = p["fc2_w"].astype(bf16)                                     # [120,84]
    f2b = p["fc2_b"].astype(f32)[None, :]                             # [1,84]
    f3w = jnp.pad(p["fc3_w"].astype(f32), ((0, 0), (0, 118))).astype(bf16)
    f3b = jnp.pad(p["fc3_b"].astype(f32), (0, 118))[None, :]          # [1,128]

    flops = 2 * Bp * (24 * 24 * 25 * 6 + 8 * 8 * 150 * 16
                      + 256 * 120 + 120 * 84 + 84 * 10)
    bytes_accessed = (4 * xhbw.size
                      + 2 * (K1.size + K2.size + F1.size + f2w.size + f3w.size)
                      + 4 * (256 + 256 + 120 + 84 + 128) + 4 * Bp * 128)

    out = pl.pallas_call(
        functools.partial(_lenet_kernel, tb=tb),
        out_shape=jax.ShapeDtypeStruct((Bp, 128), f32),
        grid=(Bp // tb,),
        in_specs=[
            pl.BlockSpec((28, tb, 28), lambda i: (0, i, 0)),          # x (batch tile)
            pl.BlockSpec((140, 256), lambda i: (0, 0)),               # conv1 weight
            pl.BlockSpec((1, 256), lambda i: (0, 0)),                 # conv1 bias
            pl.BlockSpec((640, 256), lambda i: (0, 0)),               # conv2 weight
            pl.BlockSpec((1, 256), lambda i: (0, 0)),                 # conv2 bias
            pl.BlockSpec((512, 120), lambda i: (0, 0)),               # fc1 weight
            pl.BlockSpec((1, 120), lambda i: (0, 0)),                 # fc1 bias
            pl.BlockSpec((120, 84), lambda i: (0, 0)),                # fc2 weight
            pl.BlockSpec((1, 84), lambda i: (0, 0)),                  # fc2 bias
            pl.BlockSpec((84, 128), lambda i: (0, 0)),                # fc3 weight
            pl.BlockSpec((1, 128), lambda i: (0, 0)),                 # fc3 bias
        ],
        out_specs=pl.BlockSpec((tb, 128), lambda i: (i, 0)),          # lane-dense out
        compiler_params=pltpu.CompilerParams(
            dimension_semantics=("parallel",),
            vmem_limit_bytes=48 * 1024 * 1024),
        cost_estimate=pl.CostEstimate(flops=flops, transcendentals=0,
                                      bytes_accessed=int(bytes_accessed)),
    )(xhbw, K1, b1v, K2, b2v, F1, f1b, f2w, f2b, f3w, f3b)

    return out[:B, :10]


# ----------------------------- params & reference ---------------------------

def init_params(key):
    ks = jax.random.split(key, 10)
    s = 0.05
    return {
        "conv1_w": jax.random.normal(ks[0], (6, 1, 5, 5), jnp.float32) * s,
        "conv1_b": jax.random.normal(ks[1], (6,), jnp.float32) * s,
        "conv2_w": jax.random.normal(ks[2], (16, 6, 5, 5), jnp.float32) * s,
        "conv2_b": jax.random.normal(ks[3], (16,), jnp.float32) * s,
        "fc1_w": jax.random.normal(ks[4], (16 * 4 * 4, 120), jnp.float32) * s,
        "fc1_b": jax.random.normal(ks[5], (120,), jnp.float32) * s,
        "fc2_w": jax.random.normal(ks[6], (120, 84), jnp.float32) * s,
        "fc2_b": jax.random.normal(ks[7], (84,), jnp.float32) * s,
        "fc3_w": jax.random.normal(ks[8], (84, 10), jnp.float32) * s,
        "fc3_b": jax.random.normal(ks[9], (10,), jnp.float32) * s,
    }


def reference_forward(x, p):
    """Pure-JAX (XLA, f32) reference with identical semantics to the PyTorch Net."""
    def conv(a, w, b):
        y = jax.lax.conv_general_dilated(a, w, (1, 1), "VALID",
                                         dimension_numbers=("NCHW", "OIHW", "NCHW"))
        return y + b[None, :, None, None]

    def pool(a):
        return jax.lax.reduce_window(a, -jnp.inf, jax.lax.max,
                                     (1, 1, 2, 2), (1, 1, 2, 2), "VALID")

    y = pool(jax.nn.relu(conv(x, p["conv1_w"], p["conv1_b"])))
    y = pool(jax.nn.relu(conv(y, p["conv2_w"], p["conv2_b"])))
    y = y.reshape(y.shape[0], -1)                 # NCHW flatten == torch .view
    y = jax.nn.relu(y @ p["fc1_w"] + p["fc1_b"])
    y = jax.nn.relu(y @ p["fc2_w"] + p["fc2_b"])
    return y @ p["fc3_w"] + p["fc3_b"]


if __name__ == "__main__":
    key = jax.random.PRNGKey(0)
    k_in, k_par = jax.random.split(key)
    x = jax.random.normal(k_in, (2, 1, 28, 28), jnp.float32)
    params = init_params(k_par)

    out = jax.jit(net_forward)(x, params)
    out = jax.block_until_ready(out)
    assert out.shape == (2, 10), out.shape

    # Check against the pure-JAX f32 reference.  Tolerance accounts for the bf16
    # matmul operands (f32 accumulation) used in the kernel.
    ref = reference_forward(x, params)
    denom = float(jnp.max(jnp.abs(ref))) + 1e-6
    rel = float(jnp.max(jnp.abs(out - ref))) / denom
    assert rel < 3e-2, f"mismatch vs reference: rel={rel}"

    print("KERNEL_OK")
</pallas_src>

<mosaic_0001>
module attributes {stable_mosaic.version = 11 : i64} {
  func.func @_lenet_kernel(%arg0: i32, %arg1: memref<28x8x28xf32, #tpu.memory_space<vmem>>, %arg2: memref<140x256xbf16, #tpu.memory_space<vmem>>, %arg3: memref<1x256xf32, #tpu.memory_space<vmem>>, %arg4: memref<640x256xbf16, #tpu.memory_space<vmem>>, %arg5: memref<1x256xf32, #tpu.memory_space<vmem>>, %arg6: memref<512x120xbf16, #tpu.memory_space<vmem>>, %arg7: memref<1x120xf32, #tpu.memory_space<vmem>>, %arg8: memref<120x84xbf16, #tpu.memory_space<vmem>>, %arg9: memref<1x84xf32, #tpu.memory_space<vmem>>, %arg10: memref<84x128xbf16, #tpu.memory_space<vmem>>, %arg11: memref<1x128xf32, #tpu.memory_space<vmem>>, %arg12: memref<8x128xf32, #tpu.memory_space<vmem>>) attributes {dimension_semantics = [#tpu.dimension_semantics<parallel>], iteration_bounds = array<i64: 1>, scalar_prefetch = 0 : i64, scratch_operands = 0 : i64, tpu.core_type = #tpu.core_type<tc>, window_params = [{transform_indices = @transform_0, window_bounds = array<i64: 28, 8, 28>}, {pipeline_mode = #tpu.pipeline_mode<synchronous>, transform_indices = @transform_1, window_bounds = array<i64: 140, 256>}, {pipeline_mode = #tpu.pipeline_mode<synchronous>, transform_indices = @transform_2, window_bounds = array<i64: 1, 256>}, {pipeline_mode = #tpu.pipeline_mode<synchronous>, transform_indices = @transform_3, window_bounds = array<i64: 640, 256>}, {pipeline_mode = #tpu.pipeline_mode<synchronous>, transform_indices = @transform_4, window_bounds = array<i64: 1, 256>}, {pipeline_mode = #tpu.pipeline_mode<synchronous>, transform_indices = @transform_5, window_bounds = array<i64: 512, 120>}, {pipeline_mode = #tpu.pipeline_mode<synchronous>, transform_indices = @transform_6, window_bounds = array<i64: 1, 120>}, {pipeline_mode = #tpu.pipeline_mode<synchronous>, transform_indices = @transform_7, window_bounds = array<i64: 120, 84>}, {pipeline_mode = #tpu.pipeline_mode<synchronous>, transform_indices = @transform_8, window_bounds = array<i64: 1, 84>}, {pipeline_mode = #tpu.pipeline_mode<synchronous>, transform_indices = @transform_9, window_bounds = array<i64: 84, 128>}, {pipeline_mode = #tpu.pipeline_mode<synchronous>, transform_indices = @transform_10, window_bounds = array<i64: 1, 128>}, {transform_indices = @transform_11, window_bounds = array<i64: 8, 128>}]} {
    %c0 = arith.constant 0 : index
    %c0_0 = arith.constant 0 : index
    %c0_1 = arith.constant 0 : index
    %0 = vector.load %arg1[%c0, %c0_0, %c0_1] : memref<28x8x28xf32, #tpu.memory_space<vmem>>, vector<28x8x28xf32>
    %1 = vector.extract_strided_slice %0 {offsets = [0, 0, 0], sizes = [24, 8, 28], strides = [1, 1, 1]} : vector<28x8x28xf32> to vector<24x8x28xf32>
    %2 = vector.shape_cast %1 : vector<24x8x28xf32> to vector<192x28xf32>
    %3 = vector.extract_strided_slice %0 {offsets = [1, 0, 0], sizes = [24, 8, 28], strides = [1, 1, 1]} : vector<28x8x28xf32> to vector<24x8x28xf32>
    %4 = vector.shape_cast %3 : vector<24x8x28xf32> to vector<192x28xf32>
    %5 = vector.extract_strided_slice %0 {offsets = [2, 0, 0], sizes = [24, 8, 28], strides = [1, 1, 1]} : vector<28x8x28xf32> to vector<24x8x28xf32>
    %6 = vector.shape_cast %5 : vector<24x8x28xf32> to vector<192x28xf32>
    %7 = vector.extract_strided_slice %0 {offsets = [3, 0, 0], sizes = [24, 8, 28], strides = [1, 1, 1]} : vector<28x8x28xf32> to vector<24x8x28xf32>
    %8 = vector.shape_cast %7 : vector<24x8x28xf32> to vector<192x28xf32>
    %9 = vector.extract_strided_slice %0 {offsets = [4, 0, 0], sizes = [24, 8, 28], strides = [1, 1, 1]} : vector<28x8x28xf32> to vector<24x8x28xf32>
    %10 = vector.shape_cast %9 : vector<24x8x28xf32> to vector<192x28xf32>
    %11 = tpu.concatenate %2, %4, %6, %8, %10 in 1 : vector<192x28xf32>, vector<192x28xf32>, vector<192x28xf32>, vector<192x28xf32>, vector<192x28xf32> -> vector<192x140xf32>
    %12 = arith.truncf %11 : vector<192x140xf32> to vector<192x140xbf16>
    %c0_2 = arith.constant 0 : index
    %c0_3 = arith.constant 0 : index
    %13 = vector.load %arg2[%c0_2, %c0_3] : memref<140x256xbf16, #tpu.memory_space<vmem>>, vector<140x256xbf16>
    %cst = arith.constant dense<0.000000e+00> : vector<192x256xf32>
    %14 = tpu.matmul %12, %13, %cst {dimension_numbers = #tpu.dot_dimension_numbers<[1], [0], [0], [1], [0, 0, 1, 1], [], []>} : vector<192x140xbf16>, vector<140x256xbf16>, vector<192x256xf32> -> vector<192x256xf32>
    %c0_4 = arith.constant 0 : index
    %c0_5 = arith.constant 0 : index
    %15 = vector.load %arg3[%c0_4, %c0_5] : memref<1x256xf32, #tpu.memory_space<vmem>>, vector<1x256xf32>
    %16 = vector.broadcast %15 : vector<1x256xf32> to vector<192x256xf32>
    %17 = arith.addf %14, %16 : vector<192x256xf32>
    %cst_6 = arith.constant 0.000000e+00 : f32
    %18 = vector.broadcast %cst_6 : f32 to vector<192x256xf32>
    %19 = arith.maximumf %17, %18 : vector<192x256xf32>
    %20 = vector.shape_cast %19 : vector<192x256xf32> to vector<12x2x8x256xf32>
    %21 = vector.extract_strided_slice %20 {offsets = [0, 0, 0, 0], sizes = [12, 1, 8, 256], strides = [1, 1, 1, 1]} : vector<12x2x8x256xf32> to vector<12x1x8x256xf32>
    %22 = vector.shape_cast %21 : vector<12x1x8x256xf32> to vector<12x8x256xf32>
    %23 = vector.extract_strided_slice %20 {offsets = [0, 1, 0, 0], sizes = [12, 1, 8, 256], strides = [1, 1, 1, 1]} : vector<12x2x8x256xf32> to vector<12x1x8x256xf32>
    %24 = vector.shape_cast %23 : vector<12x1x8x256xf32> to vector<12x8x256xf32>
    %25 = arith.maximumf %22, %24 : vector<12x8x256xf32>
    %26 = vector.extract_strided_slice %25 {offsets = [0, 0, 0], sizes = [12, 8, 128], strides = [1, 1, 1]} : vector<12x8x256xf32> to vector<12x8x128xf32>
    %27 = vector.extract_strided_slice %25 {offsets = [0, 0, 128], sizes = [12, 8, 128], strides = [1, 1, 1]} : vector<12x8x256xf32> to vector<12x8x128xf32>
    %28 = arith.maximumf %26, %27 : vector<12x8x128xf32>
    %29 = vector.extract_strided_slice %28 {offsets = [0, 0, 0], sizes = [8, 8, 128], strides = [1, 1, 1]} : vector<12x8x128xf32> to vector<8x8x128xf32>
    %30 = vector.shape_cast %29 : vector<8x8x128xf32> to vector<64x128xf32>
    %31 = vector.extract_strided_slice %28 {offsets = [1, 0, 0], sizes = [8, 8, 128], strides = [1, 1, 1]} : vector<12x8x128xf32> to vector<8x8x128xf32>
    %32 = vector.shape_cast %31 : vector<8x8x128xf32> to vector<64x128xf32>
    %33 = vector.extract_strided_slice %28 {offsets = [2, 0, 0], sizes = [8, 8, 128], strides = [1, 1, 1]} : vector<12x8x128xf32> to vector<8x8x128xf32>
    %34 = vector.shape_cast %33 : vector<8x8x128xf32> to vector<64x128xf32>
    %35 = vector.extract_strided_slice %28 {offsets = [3, 0, 0], sizes = [8, 8, 128], strides = [1, 1, 1]} : vector<12x8x128xf32> to vector<8x8x128xf32>
    %36 = vector.shape_cast %35 : vector<8x8x128xf32> to vector<64x128xf32>
    %37 = vector.extract_strided_slice %28 {offsets = [4, 0, 0], sizes = [8, 8, 128], strides = [1, 1, 1]} : vector<12x8x128xf32> to vector<8x8x128xf32>
    %38 = vector.shape_cast %37 : vector<8x8x128xf32> to vector<64x128xf32>
    %39 = tpu.concatenate %30, %32, %34, %36, %38 in 1 : vector<64x128xf32>, vector<64x128xf32>, vector<64x128xf32>, vector<64x128xf32>, vector<64x128xf32> -> vector<64x640xf32>
    %40 = arith.truncf %39 : vector<64x640xf32> to vector<64x640xbf16>
    %c0_7 = arith.constant 0 : index
    %c0_8 = arith.constant 0 : index
    %41 = vector.load %arg4[%c0_7, %c0_8] : memref<640x256xbf16, #tpu.memory_space<vmem>>, vector<640x256xbf16>
    %cst_9 = arith.constant dense<0.000000e+00> : vector<64x256xf32>
    %42 = tpu.matmul %40, %41, %cst_9 {dimension_numbers = #tpu.dot_dimension_numbers<[1], [0], [0], [1], [0, 0, 1, 1], [], []>} : vector<64x640xbf16>, vector<640x256xbf16>, vector<64x256xf32> -> vector<64x256xf32>
    %c0_10 = arith.constant 0 : index
    %c0_11 = arith.constant 0 : index
    %43 = vector.load %arg5[%c0_10, %c0_11] : memref<1x256xf32, #tpu.memory_space<vmem>>, vector<1x256xf32>
    %44 = vector.broadcast %43 : vector<1x256xf32> to vector<64x256xf32>
    %45 = arith.addf %42, %44 : vector<64x256xf32>
    %cst_12 = arith.constant 0.000000e+00 : f32
    %46 = vector.broadcast %cst_12 : f32 to vector<64x256xf32>
    %47 = arith.maximumf %45, %46 : vector<64x256xf32>
    %48 = vector.shape_cast %47 : vector<64x256xf32> to vector<4x2x8x256xf32>
    %49 = vector.extract_strided_slice %48 {offsets = [0, 0, 0, 0], sizes = [4, 1, 8, 256], strides = [1, 1, 1, 1]} : vector<4x2x8x256xf32> to vector<4x1x8x256xf32>
    %50 = vector.shape_cast %49 : vector<4x1x8x256xf32> to vector<4x8x256xf32>
    %51 = vector.extract_strided_slice %48 {offsets = [0, 1, 0, 0], sizes = [4, 1, 8, 256], strides = [1, 1, 1, 1]} : vector<4x2x8x256xf32> to vector<4x1x8x256xf32>
    %52 = vector.shape_cast %51 : vector<4x1x8x256xf32> to vector<4x8x256xf32>
    %53 = arith.maximumf %50, %52 : vector<4x8x256xf32>
    %54 = vector.extract_strided_slice %53 {offsets = [0, 0, 0], sizes = [4, 8, 128], strides = [1, 1, 1]} : vector<4x8x256xf32> to vector<4x8x128xf32>
    %55 = vector.extract_strided_slice %53 {offsets = [0, 0, 128], sizes = [4, 8, 128], strides = [1, 1, 1]} : vector<4x8x256xf32> to vector<4x8x128xf32>
    %56 = arith.maximumf %54, %55 : vector<4x8x128xf32>
    %57 = vector.extract_strided_slice %56 {offsets = [0, 0, 0], sizes = [1, 8, 128], strides = [1, 1, 1]} : vector<4x8x128xf32> to vector<1x8x128xf32>
    %58 = vector.shape_cast %57 : vector<1x8x128xf32> to vector<8x128xf32>
    %59 = vector.extract_strided_slice %56 {offsets = [1, 0, 0], sizes = [1, 8, 128], strides = [1, 1, 1]} : vector<4x8x128xf32> to vector<1x8x128xf32>
    %60 = vector.shape_cast %59 : vector<1x8x128xf32> to vector<8x128xf32>
    %61 = vector.extract_strided_slice %56 {offsets = [2, 0, 0], sizes = [1, 8, 128], strides = [1, 1, 1]} : vector<4x8x128xf32> to vector<1x8x128xf32>
    %62 = vector.shape_cast %61 : vector<1x8x128xf32> to vector<8x128xf32>
    %63 = vector.extract_strided_slice %56 {offsets = [3, 0, 0], sizes = [1, 8, 128], strides = [1, 1, 1]} : vector<4x8x128xf32> to vector<1x8x128xf32>
    %64 = vector.shape_cast %63 : vector<1x8x128xf32> to vector<8x128xf32>
    %65 = tpu.concatenate %58, %60, %62, %64 in 1 : vector<8x128xf32>, vector<8x128xf32>, vector<8x128xf32>, vector<8x128xf32> -> vector<8x512xf32>
    %66 = arith.truncf %65 : vector<8x512xf32> to vector<8x512xbf16>
    %c0_13 = arith.constant 0 : index
    %c0_14 = arith.constant 0 : index
    %67 = vector.load %arg6[%c0_13, %c0_14] : memref<512x120xbf16, #tpu.memory_space<vmem>>, vector<512x120xbf16>
    %cst_15 = arith.constant dense<0.000000e+00> : vector<8x120xf32>
    %68 = tpu.matmul %66, %67, %cst_15 {dimension_numbers = #tpu.dot_dimension_numbers<[1], [0], [0], [1], [0, 0, 1, 1], [], []>} : vector<8x512xbf16>, vector<512x120xbf16>, vector<8x120xf32> -> vector<8x120xf32>
    %c0_16 = arith.constant 0 : index
    %c0_17 = arith.constant 0 : index
    %69 = vector.load %arg7[%c0_16, %c0_17] : memref<1x120xf32, #tpu.memory_space<vmem>>, vector<1x120xf32>
    %70 = vector.broadcast %69 : vector<1x120xf32> to vector<8x120xf32>
    %71 = arith.addf %68, %70 : vector<8x120xf32>
    %cst_18 = arith.constant 0.000000e+00 : f32
    %72 = vector.broadcast %cst_18 : f32 to vector<8x120xf32>
    %73 = arith.maximumf %71, %72 : vector<8x120xf32>
    %74 = arith.truncf %73 : vector<8x120xf32> to vector<8x120xbf16>
    %c0_19 = arith.constant 0 : index
    %c0_20 = arith.constant 0 : index
    %75 = vector.load %arg8[%c0_19, %c0_20] : memref<120x84xbf16, #tpu.memory_space<vmem>>, vector<120x84xbf16>
    %cst_21 = arith.constant dense<0.000000e+00> : vector<8x84xf32>
    %76 = tpu.matmul %74, %75, %cst_21 {dimension_numbers = #tpu.dot_dimension_numbers<[1], [0], [0], [1], [0, 0, 1, 1], [], []>} : vector<8x120xbf16>, vector<120x84xbf16>, vector<8x84xf32> -> vector<8x84xf32>
    %c0_22 = arith.constant 0 : index
    %c0_23 = arith.constant 0 : index
    %77 = vector.load %arg9[%c0_22, %c0_23] : memref<1x84xf32, #tpu.memory_space<vmem>>, vector<1x84xf32>
    %78 = vector.broadcast %77 : vector<1x84xf32> to vector<8x84xf32>
    %79 = arith.addf %76, %78 : vector<8x84xf32>
    %cst_24 = arith.constant 0.000000e+00 : f32
    %80 = vector.broadcast %cst_24 : f32 to vector<8x84xf32>
    %81 = arith.maximumf %79, %80 : vector<8x84xf32>
    %82 = arith.truncf %81 : vector<8x84xf32> to vector<8x84xbf16>
    %c0_25 = arith.constant 0 : index
    %c0_26 = arith.constant 0 : index
    %83 = vector.load %arg10[%c0_25, %c0_26] : memref<84x128xbf16, #tpu.memory_space<vmem>>, vector<84x128xbf16>
    %cst_27 = arith.constant dense<0.000000e+00> : vector<8x128xf32>
    %84 = tpu.matmul %82, %83, %cst_27 {dimension_numbers = #tpu.dot_dimension_numbers<[1], [0], [0], [1], [0, 0, 1, 1], [], []>} : vector<8x84xbf16>, vector<84x128xbf16>, vector<8x128xf32> -> vector<8x128xf32>
    %c0_28 = arith.constant 0 : index
    %c0_29 = arith.constant 0 : index
    %85 = vector.load %arg11[%c0_28, %c0_29] : memref<1x128xf32, #tpu.memory_space<vmem>>, vector<1x128xf32>
    %86 = vector.broadcast %85 : vector<1x128xf32> to vector<8x128xf32>
    %87 = arith.addf %84, %86 : vector<8x128xf32>
    %c0_30 = arith.constant 0 : index
    %c0_31 = arith.constant 0 : index
    %88 = vector.load %arg12[%c0_30, %c0_31] : memref<8x128xf32, #tpu.memory_space<vmem>>, vector<8x128xf32>
    tpu.vector_store %arg12[%c0_30, %c0_31], %87 {strides = array<i32>} : memref<8x128xf32, #tpu.memory_space<vmem>>, vector<8x128xf32>,
    return
  }
  func.func @transform_0(%arg0: i32) -> (i32, i32, i32) {
    %c0_i32 = arith.constant 0 : i32
    %c0_i32_0 = arith.constant 0 : i32
    %c0_i32_1 = arith.constant 0 : i32
    return %c0_i32, %arg0, %c0_i32_0 : i32, i32, i32
  }
  func.func @transform_1(%arg0: i32) -> (i32, i32) {
    %c0_i32 = arith.constant 0 : i32
    %c0_i32_0 = arith.constant 0 : i32
    %c0_i32_1 = arith.constant 0 : i32
    return %c0_i32, %c0_i32_0 : i32, i32
  }
  func.func @transform_2(%arg0: i32) -> (i32, i32) {
    %c0_i32 = arith.constant 0 : i32
    %c0_i32_0 = arith.constant 0 : i32
    %c0_i32_1 = arith.constant 0 : i32
    return %c0_i32, %c0_i32_0 : i32, i32
  }
  func.func @transform_3(%arg0: i32) -> (i32, i32) {
    %c0_i32 = arith.constant 0 : i32
    %c0_i32_0 = arith.constant 0 : i32
    %c0_i32_1 = arith.constant 0 : i32
    return %c0_i32, %c0_i32_0 : i32, i32
  }
  func.func @transform_4(%arg0: i32) -> (i32, i32) {
    %c0_i32 = arith.constant 0 : i32
    %c0_i32_0 = arith.constant 0 : i32
    %c0_i32_1 = arith.constant 0 : i32
    return %c0_i32, %c0_i32_0 : i32, i32
  }
  func.func @transform_5(%arg0: i32) -> (i32, i32) {
    %c0_i32 = arith.constant 0 : i32
    %c0_i32_0 = arith.constant 0 : i32
    %c0_i32_1 = arith.constant 0 : i32
    return %c0_i32, %c0_i32_0 : i32, i32
  }
  func.func @transform_6(%arg0: i32) -> (i32, i32) {
    %c0_i32 = arith.constant 0 : i32
    %c0_i32_0 = arith.constant 0 : i32
    %c0_i32_1 = arith.constant 0 : i32
    return %c0_i32, %c0_i32_0 : i32, i32
  }
  func.func @transform_7(%arg0: i32) -> (i32, i32) {
    %c0_i32 = arith.constant 0 : i32
    %c0_i32_0 = arith.constant 0 : i32
    %c0_i32_1 = arith.constant 0 : i32
    return %c0_i32, %c0_i32_0 : i32, i32
  }
  func.func @transform_8(%arg0: i32) -> (i32, i32) {
    %c0_i32 = arith.constant 0 : i32
    %c0_i32_0 = arith.constant 0 : i32
    %c0_i32_1 = arith.constant 0 : i32
    return %c0_i32, %c0_i32_0 : i32, i32
  }
  func.func @transform_9(%arg0: i32) -> (i32, i32) {
    %c0_i32 = arith.constant 0 : i32
    %c0_i32_0 = arith.constant 0 : i32
    %c0_i32_1 = arith.constant 0 : i32
    return %c0_i32, %c0_i32_0 : i32, i32
  }
  func.func @transform_10(%arg0: i32) -> (i32, i32) {
    %c0_i32 = arith.constant 0 : i32
    %c0_i32_0 = arith.constant 0 : i32
    %c0_i32_1 = arith.constant 0 : i32
    return %c0_i32, %c0_i32_0 : i32, i32
  }
  func.func @transform_11(%arg0: i32) -> (i32, i32) {
    %c0_i32 = arith.constant 0 : i32
    %c0_i32_0 = arith.constant 0 : i32
    return %arg0, %c0_i32 : i32, i32
  }
}

</mosaic_0001>

<llo_original>
// kernel: tile.13
$region0: #{tile.13}
  #allocation0 [shape = 's32[1]{0}', space=sflag, size = 0x4, scoped, tag = 'scoped memory for tile.13']
  %s0 = inlined_call_operand.vmem [shape: f32[6], index: 0, kind: input, shape index: {}]
  %s1 = inlined_call_operand.vmem [shape: f32[12,6], index: 1, kind: output, shape index: {}]
  // Predicated region
  $region2: #{tile.13} parent=0 // pred_check
    _
  $region3: #{tile.13} parent=0 // pred_check_branch
    %3 = sbr.rel (0) target = $region5
  $region4: #{tile.13} parent=0 // pred_region
    _
  $region5: #{tile.13} parent=0 // pred_fallthru
    _
  %v4 = vld [vmem:[%s0] ss:$0 sm:$0xff]
  %5 = vst [vmem:[%s1] sm:$0xff] %v4
  %s6 = scalar_lea.vmem %s1, 8
  %7 = vst [vmem:[%s6] sm:$0xff] %v4

// kernel: tile.14
$region0: #{tile.14}
  %s0 = inlined_call_operand.vmem [shape: f32[12,6], index: 0, kind: input, shape index: {}]
  %s1 = inlined_call_operand.vmem [shape: f32[72], index: 1, kind: output, shape index: {}]
  $region1: #{tile.14} parent=0
    #allocation0 [shape = 'u8[4096]{0}', space=vmem, size = 0x1000, scoped, tag = 'scoped mem for output reshape']
    %v2 = vld [vmem:[%s0] sm:$0x1]
    %vm3 = vcmask 48128
    %4 = vst.msk [vmem:[#allocation0] sm:$0x1] %vm3, %v2
    %s5 = scalar_lea.vmem %s0, 11
    %v6 = vld [vmem:[%s5] sm:$0x1]
    %7 = vrot.lane.b32.xlu0 %v6, 66
    %v8 = vpop.permute.xlu0 %7
    %vm9 = vcmask 589328
    %10 = vst.msk [vmem:[#allocation0] sm:$0x1] %vm9, %v8
    %s11 = scalar_lea.vmem %s0, 10
    %v12 = vld [vmem:[%s11] sm:$0x1]
    %13 = vrot.lane.b32.xlu0 %v12, 60
    %v14 = vpop.permute.xlu0 %13
    %vm15 = vcmask 540128
    %16 = vst.msk [vmem:[#allocation0] sm:$0x1] %vm15, %v14
    %s17 = scalar_lea.vmem %s0, 9
    %v18 = vld [vmem:[%s17] sm:$0x1]
    %19 = vrot.lane.b32.xlu0 %v18, 54
    %v20 = vpop.permute.xlu0 %19
    %vm21 = vcmask 490928
    %22 = vst.msk [vmem:[#allocation0] sm:$0x1] %vm21, %v20
    %s23 = scalar_lea.vmem %s0, 8
    %v24 = vld [vmem:[%s23] sm:$0x1]
    %25 = vrot.lane.b32.xlu0 %v24, 48
    %v26 = vpop.permute.xlu0 %25
    %vm27 = vcmask 441728
    %28 = vst.msk [vmem:[#allocation0] sm:$0x1] %vm27, %v26
    %s29 = scalar_lea.vmem %s0, 7
    %v30 = vld [vmem:[%s29] sm:$0x1]
    %31 = vrot.lane.b32.xlu0 %v30, 42
    %v32 = vpop.permute.xlu0 %31
    %vm33 = vcmask 392528
    %34 = vst.msk [vmem:[#allocation0] sm:$0x1] %vm33, %v32
    %s35 = scalar_lea.vmem %s0, 6
    %v36 = vld [vmem:[%s35] sm:$0x1]
    %37 = vrot.lane.b32.xlu0 %v36, 36
    %v38 = vpop.permute.xlu0 %37
    %vm39 = vcmask 343328
    %40 = vst.msk [vmem:[#allocation0] sm:$0x1] %vm39, %v38
    %s41 = scalar_lea.vmem %s0, 5
    %v42 = vld [vmem:[%s41] sm:$0x1]
    %43 = vrot.lane.b32.xlu0 %v42, 30
    %v44 = vpop.permute.xlu0 %43
    %vm45 = vcmask 294128
    %46 = vst.msk [vmem:[#allocation0] sm:$0x1] %vm45, %v44
    %s47 = scalar_lea.vmem %s0, 4
    %v48 = vld [vmem:[%s47] sm:$0x1]
    %49 = vrot.lane.b32.xlu0 %v48, 24
    %v50 = vpop.permute.xlu0 %49
    %vm51 = vcmask 244928
    %52 = vst.msk [vmem:[#allocation0] sm:$0x1] %vm51, %v50
    %s53 = scalar_lea.vmem %s0, 3
    %v54 = vld [vmem:[%s53] sm:$0x1]
    %55 = vrot.lane.b32.xlu0 %v54, 18
    %v56 = vpop.permute.xlu0 %55
    %vm57 = vcmask 195728
    %58 = vst.msk [vmem:[#allocation0] sm:$0x1] %vm57, %v56
    %s59 = scalar_lea.vmem %s0, 2
    %v60 = vld [vmem:[%s59] sm:$0x1]
    %61 = vrot.lane.b32.xlu0 %v60, 12
    %v62 = vpop.permute.xlu0 %61
    %vm63 = vcmask 146528
    %64 = vst.msk [vmem:[#allocation0] sm:$0x1] %vm63, %v62
    %s65 = scalar_lea.vmem %s0, 1
    %v66 = vld [vmem:[%s65] sm:$0x1]
    %67 = vrot.lane.b32.xlu0 %v66, 6
    %v68 = vpop.permute.xlu0 %67
    %vm69 = vcmask 97328
    %70 = vst.msk [vmem:[#allocation0] sm:$0x1] %vm69, %v68
    %s72 = sshllo.u32 0, 1
    %v74 = vld [vmem:[#allocation0] sm:%s72]
    %s75 = sshllo.u32 0, 1
    %76 = vst [vmem:[%s1] sm:%s75] %v74

// kernel: tile.18
$region0: #{tile.18}
  #allocation0 [shape = 's32[1]{0}', space=sflag, size = 0x4, scoped, tag = 'scoped memory for tile.18']
  %s0 = inlined_call_operand.vmem [shape: f32[16], index: 0, kind: input, shape index: {}]
  %s1 = inlined_call_operand.vmem [shape: f32[4,16], index: 1, kind: output, shape index: {}]
  // Predicated region
  $region2: #{tile.18} parent=0 // pred_check
    _
  $region3: #{tile.18} parent=0 // pred_check_branch
    %3 = sbr.rel (0) target = $region5
  $region4: #{tile.18} parent=0 // pred_region
    _
  $region5: #{tile.18} parent=0 // pred_fallthru
    _
  %v4 = vld [vmem:[%s0] ss:$0 sm:$0xff]
  %5 = vst [vmem:[%s1] sm:$0xf] %v4

// kernel: tile.19
$region0: #{tile.19}
  %s0 = inlined_call_operand.vmem [shape: f32[4,16], index: 0, kind: input, shape index: {}]
  %s1 = inlined_call_operand.vmem [shape: f32[64], index: 1, kind: output, shape index: {}]
  $region1: #{tile.19} parent=0
    #allocation0 [shape = 'u8[4096]{0}', space=vmem, size = 0x1000, scoped, tag = 'scoped mem for output reshape']
    #allocation1 [shape = 'u8[4096]{0}', space=vmem, size = 0x1000, scoped, tag = 'scoped mem for input reshape']
    %s3 = sshllo.u32 0, 4
    %v4 = vld [vmem:[%s0] sm:%s3]
    %5 = vst [vmem:[#allocation1] sm:%s3] %v4
    %v6 = vld [vmem:[#allocation1] sm:$0x1]
    %vm7 = vcmask 130048
    %8 = vst.msk [vmem:[#allocation0] sm:$0x1] %vm7, %v6
    %s9 = scalar_lea.vmem [#allocation1], 3
    %v10 = vld [vmem:[%s9] sm:$0x1]
    %11 = vrot.lane.b32.xlu0 %v10, 48
    %v12 = vpop.permute.xlu0 %11
    %vm13 = vcmask 523648
    %14 = vst.msk [vmem:[#allocation0] sm:$0x1] %vm13, %v12
    %s15 = scalar_lea.vmem [#allocation1], 2
    %v16 = vld [vmem:[%s15] sm:$0x1]
    %17 = vrot.lane.b32.xlu0 %v16, 32
    %v18 = vpop.permute.xlu0 %17
    %vm19 = vcmask 392448
    %20 = vst.msk [vmem:[#allocation0] sm:$0x1] %vm19, %v18
    %s21 = scalar_lea.vmem [#allocation1], 1
    %v22 = vld [vmem:[%s21] sm:$0x1]
    %23 = vrot.lane.b32.xlu0 %v22, 16
    %v24 = vpop.permute.xlu0 %23
    %vm25 = vcmask 261248
    %26 = vst.msk [vmem:[#allocation0] sm:$0x1] %vm25, %v24
    %s28 = sshllo.u32 0, 1
    %v30 = vld [vmem:[#allocation0] sm:%s28]
    %s31 = sshllo.u32 0, 1
    %32 = vst [vmem:[%s1] sm:%s31] %v30

// kernel: net_forward.1
$region0: #{net_forward.1}
  #allocation0 [shape = 'u32[]', space=smem, size = 0x4, offset = 0x4, fixed_abs, tag = 'smem constant byte address 0x4 - core index']
  #allocation1 [shape = 'u32[144,128]{1,0:T(1,128)}', space=vmem, size = 0x12000, scoped, tag = 'internal scratch']
  %s0 = inlined_call_operand.vmem [shape: f32[28,8,28], index: 0, kind: input, shape index: {}]
  %s1 = inlined_call_operand.vmem [shape: bf16[140,256], index: 1, kind: input, shape index: {}]
  %s2 = inlined_call_operand.vmem [shape: f32[1,256], index: 2, kind: input, shape index: {}]
  %s3 = inlined_call_operand.vmem [shape: bf16[640,256], index: 3, kind: input, shape index: {}]
  %s4 = inlined_call_operand.vmem [shape: f32[1,256], index: 4, kind: input, shape index: {}]
  %s5 = inlined_call_operand.vmem [shape: bf16[512,120], index: 5, kind: input, shape index: {}]
  %s6 = inlined_call_operand.vmem [shape: f32[1,120], index: 6, kind: input, shape index: {}]
  %s7 = inlined_call_operand.vmem [shape: bf16[120,84], index: 7, kind: input, shape index: {}]
  %s8 = inlined_call_operand.vmem [shape: f32[1,84], index: 8, kind: input, shape index: {}]
  %s9 = inlined_call_operand.vmem [shape: bf16[84,128], index: 9, kind: input, shape index: {}]
  %s10 = inlined_call_operand.vmem [shape: f32[1,128], index: 10, kind: input, shape index: {}]
  %s11 = inlined_call_operand.vmem [shape: f32[8,128], index: 11, kind: output, shape index: {}]
  %s12 = sld [smem:[#allocation0]]
  $region54: #{net_forward.1} parent=0
    _
  %s14 = ssub.s32 1, %s12
  %s15 = scalar_select 0, %s14, %s12
  // Predicated region
  $region2: #{net_forward.1} parent=0 // pred_check
    _
  $region3: #{net_forward.1} parent=0 // pred_check_branch
    %17 = sbr.rel (0) target = $region5
  $region4: #{net_forward.1} parent=0 // pred_region
    _
  $region5: #{net_forward.1} parent=0 // pred_fallthru
    _
  // Predicated region
  $region6: #{net_forward.1} parent=0 // pred_check
    _
  $region7: #{net_forward.1} parent=0 // pred_check_branch
    %19 = sbr.rel (0) target = $region9
  $region8: #{net_forward.1} parent=0 // pred_region
    _
  $region9: #{net_forward.1} parent=0 // pred_fallthru
    _
  // Predicated region
  $region10: #{net_forward.1} parent=0 // pred_check
    _
  $region11: #{net_forward.1} parent=0 // pred_check_branch
    %21 = sbr.rel (0) target = $region13
  $region12: #{net_forward.1} parent=0 // pred_region
    _
  $region13: #{net_forward.1} parent=0 // pred_fallthru
    _
  // Predicated region
  $region14: #{net_forward.1} parent=0 // pred_check
    _
  $region15: #{net_forward.1} parent=0 // pred_check_branch
    %23 = sbr.rel (0) target = $region17
  $region16: #{net_forward.1} parent=0 // pred_region
    _
  $region17: #{net_forward.1} parent=0 // pred_fallthru
    _
  // Predicated region
  $region18: #{net_forward.1} parent=0 // pred_check
    _
  $region19: #{net_forward.1} parent=0 // pred_check_branch
    %25 = sbr.rel (0) target = $region21
  $region20: #{net_forward.1} parent=0 // pred_region
    _
  $region21: #{net_forward.1} parent=0 // pred_fallthru
    _
  // Predicated region
  $region22: #{net_forward.1} parent=0 // pred_check
    _
  $region23: #{net_forward.1} parent=0 // pred_check_branch
    %27 = sbr.rel (0) target = $region25
  $region24: #{net_forward.1} parent=0 // pred_region
    _
  $region25: #{net_forward.1} parent=0 // pred_fallthru
    _
  // Predicated region
  $region26: #{net_forward.1} parent=0 // pred_check
    _
  $region27: #{net_forward.1} parent=0 // pred_check_branch
    %29 = sbr.rel (0) target = $region29
  $region28: #{net_forward.1} parent=0 // pred_region
    _
  $region29: #{net_forward.1} parent=0 // pred_fallthru
    _
  // Predicated region
  $region30: #{net_forward.1} parent=0 // pred_check
    _
  $region31: #{net_forward.1} parent=0 // pred_check_branch
    %31 = sbr.rel (0) target = $region33
  $region32: #{net_forward.1} parent=0 // pred_region
    _
  $region33: #{net_forward.1} parent=0 // pred_fallthru
    _
  // Predicated region
  $region34: #{net_forward.1} parent=0 // pred_check
    _
  $region35: #{net_forward.1} parent=0 // pred_check_branch
    %33 = sbr.rel (0) target = $region37
  $region36: #{net_forward.1} parent=0 // pred_region
    _
  $region37: #{net_forward.1} parent=0 // pred_fallthru
    _
  // Predicated region
  $region38: #{net_forward.1} parent=0 // pred_check
    _
  $region39: #{net_forward.1} parent=0 // pred_check_branch
    %35 = sbr.rel (0) target = $region41
  $region40: #{net_forward.1} parent=0 // pred_region
    _
  $region41: #{net_forward.1} parent=0 // pred_fallthru
    _
  // Predicated region
  $region42: #{net_forward.1} parent=0 // pred_check
    _
  $region43: #{net_forward.1} parent=0 // pred_check_branch
    %37 = sbr.rel (0) target = $region45
  $region44: #{net_forward.1} parent=0 // pred_region
    _
  $region45: #{net_forward.1} parent=0 // pred_fallthru
    _
  %v39 = vld [vmem:[%s0] sm:$0xff]
  %v40 = vld [vmem:[%s0 + $0x8] sm:$0xff]
  %v41 = vld [vmem:[%s0 + $0x10] sm:$0xff]
  %v42 = vld [vmem:[%s0 + $0x18] sm:$0xff]
  %v43 = vld [vmem:[%s0 + $0x20] sm:$0xff]
  %v44 = vld [vmem:[%s0 + $0x28] sm:$0xff]
  %v45 = vld [vmem:[%s0 + $0x30] sm:$0xff]
  %v46 = vld [vmem:[%s0 + $0x38] sm:$0xff]
  %v47 = vld [vmem:[%s0 + $0x40] sm:$0xff]
  %v48 = vld [vmem:[%s0 + $0x48] sm:$0xff]
  %v49 = vld [vmem:[%s0 + $0x50] sm:$0xff]
  %v50 = vld [vmem:[%s0 + $0x58] sm:$0xff]
  %v51 = vld [vmem:[%s0 + $0x60] sm:$0xff]
  %v52 = vld [vmem:[%s0 + $0x68] sm:$0xff]
  %v53 = vld [vmem:[%s0 + $0x70] sm:$0xff]
  %v54 = vld [vmem:[%s0 + $0x78] sm:$0xff]
  %v55 = vld [vmem:[%s0 + $0x80] sm:$0xff]
  %v56 = vld [vmem:[%s0 + $0x88] sm:$0xff]
  %v57 = vld [vmem:[%s0 + $0x90] sm:$0xff]
  %v58 = vld [vmem:[%s0 + $0x98] sm:$0xff]
  %v59 = vld [vmem:[%s0 + $0xa0] sm:$0xff]
  %v60 = vld [vmem:[%s0 + $0xa8] sm:$0xff]
  %v61 = vld [vmem:[%s0 + $0xb0] sm:$0xff]
  %v62 = vld [vmem:[%s0 + $0xb8] sm:$0xff]
  %v63 = vld [vmem:[%s0 + $0xc0] sm:$0xff]
  %v64 = vld [vmem:[%s0 + $0xc8] sm:$0xff]
  %v65 = vld [vmem:[%s0 + $0xd0] sm:$0xff]
  %v66 = vld [vmem:[%s0 + $0xd8] sm:$0xff]
  %91 = vrot.lane.b32.xlu0 %v40, 28
  %v92 = vpop.permute.xlu0 %91
  %93 = vrot.lane.b32.xlu0 %v41, 28
  %v94 = vpop.permute.xlu0 %93
  %95 = vrot.lane.b32.xlu0 %v42, 28
  %v96 = vpop.permute.xlu0 %95
  %97 = vrot.lane.b32.xlu0 %v43, 28
  %v98 = vpop.permute.xlu0 %97
  %99 = vrot.lane.b32.xlu0 %v44, 28
  %v100 = vpop.permute.xlu0 %99
  %101 = vrot.lane.b32.xlu0 %v45, 28
  %v102 = vpop.permute.xlu0 %101
  %103 = vrot.lane.b32.xlu0 %v46, 28
  %v104 = vpop.permute.xlu0 %103
  %105 = vrot.lane.b32.xlu0 %v47, 28
  %v106 = vpop.permute.xlu0 %105
  %107 = vrot.lane.b32.xlu0 %v48, 28
  %v108 = vpop.permute.xlu0 %107
  %109 = vrot.lane.b32.xlu0 %v49, 28
  %v110 = vpop.permute.xlu0 %109
  %111 = vrot.lane.b32.xlu0 %v50, 28
  %v112 = vpop.permute.xlu0 %111
  %113 = vrot.lane.b32.xlu0 %v51, 28
  %v114 = vpop.permute.xlu0 %113
  %115 = vrot.lane.b32.xlu0 %v52, 28
  %v116 = vpop.permute.xlu0 %115
  %117 = vrot.lane.b32.xlu0 %v53, 28
  %v118 = vpop.permute.xlu0 %117
  %119 = vrot.lane.b32.xlu0 %v54, 28
  %v120 = vpop.permute.xlu0 %119
  %121 = vrot.lane.b32.xlu0 %v55, 28
  %v122 = vpop.permute.xlu0 %121
  %123 = vrot.lane.b32.xlu0 %v56, 28
  %v124 = vpop.permute.xlu0 %123
  %125 = vrot.lane.b32.xlu0 %v57, 28
  %v126 = vpop.permute.xlu0 %125
  %127 = vrot.lane.b32.xlu0 %v58, 28
  %v128 = vpop.permute.xlu0 %127
  %129 = vrot.lane.b32.xlu0 %v59, 28
  %v130 = vpop.permute.xlu0 %129
  %131 = vrot.lane.b32.xlu0 %v60, 28
  %v132 = vpop.permute.xlu0 %131
  %133 = vrot.lane.b32.xlu0 %v61, 28
  %v134 = vpop.permute.xlu0 %133
  %135 = vrot.lane.b32.xlu0 %v62, 28
  %v136 = vpop.permute.xlu0 %135
  %137 = vrot.lane.b32.xlu0 %v63, 28
  %v138 = vpop.permute.xlu0 %137
  %164 = vrot.lane.b32.xlu0 %v41, 56
  %v165 = vpop.permute.xlu0 %164
  %166 = vrot.lane.b32.xlu0 %v42, 56
  %v167 = vpop.permute.xlu0 %166
  %168 = vrot.lane.b32.xlu0 %v43, 56
  %v169 = vpop.permute.xlu0 %168
  %170 = vrot.lane.b32.xlu0 %v44, 56
  %v171 = vpop.permute.xlu0 %170
  %172 = vrot.lane.b32.xlu0 %v45, 56
  %v173 = vpop.permute.xlu0 %172
  %174 = vrot.lane.b32.xlu0 %v46, 56
  %v175 = vpop.permute.xlu0 %174
  %176 = vrot.lane.b32.xlu0 %v47, 56
  %v177 = vpop.permute.xlu0 %176
  %178 = vrot.lane.b32.xlu0 %v48, 56
  %v179 = vpop.permute.xlu0 %178
  %180 = vrot.lane.b32.xlu0 %v49, 56
  %v181 = vpop.permute.xlu0 %180
  %182 = vrot.lane.b32.xlu0 %v50, 56
  %v183 = vpop.permute.xlu0 %182
  %184 = vrot.lane.b32.xlu0 %v51, 56
  %v185 = vpop.permute.xlu0 %184
  %186 = vrot.lane.b32.xlu0 %v52, 56
  %v187 = vpop.permute.xlu0 %186
  %188 = vrot.lane.b32.xlu0 %v53, 56
  %v189 = vpop.permute.xlu0 %188
  %190 = vrot.lane.b32.xlu0 %v54, 56
  %v191 = vpop.permute.xlu0 %190
  %192 = vrot.lane.b32.xlu0 %v55, 56
  %v193 = vpop.permute.xlu0 %192
  %194 = vrot.lane.b32.xlu0 %v56, 56
  %v195 = vpop.permute.xlu0 %194
  %196 = vrot.lane.b32.xlu0 %v57, 56
  %v197 = vpop.permute.xlu0 %196
  %198 = vrot.lane.b32.xlu0 %v58, 56
  %v199 = vpop.permute.xlu0 %198
  %200 = vrot.lane.b32.xlu0 %v59, 56
  %v201 = vpop.permute.xlu0 %200
  %202 = vrot.lane.b32.xlu0 %v60, 56
  %v203 = vpop.permute.xlu0 %202
  %204 = vrot.lane.b32.xlu0 %v61, 56
  %v205 = vpop.permute.xlu0 %204
  %206 = vrot.lane.b32.xlu0 %v62, 56
  %v207 = vpop.permute.xlu0 %206
  %208 = vrot.lane.b32.xlu0 %v63, 56
  %v209 = vpop.permute.xlu0 %208
  %210 = vrot.lane.b32.xlu0 %v64, 56
  %v211 = vpop.permute.xlu0 %210
  %237 = vrot.lane.b32.xlu0 %v42, 84
  %v238 = vpop.permute.xlu0 %237
  %239 = vrot.lane.b32.xlu0 %v43, 84
  %v240 = vpop.permute.xlu0 %239
  %241 = vrot.lane.b32.xlu0 %v44, 84
  %v242 = vpop.permute.xlu0 %241
  %243 = vrot.lane.b32.xlu0 %v45, 84
  %v244 = vpop.permute.xlu0 %243
  %245 = vrot.lane.b32.xlu0 %v46, 84
  %v246 = vpop.permute.xlu0 %245
  %247 = vrot.lane.b32.xlu0 %v47, 84
  %v248 = vpop.permute.xlu0 %247
  %249 = vrot.lane.b32.xlu0 %v48, 84
  %v250 = vpop.permute.xlu0 %249
  %251 = vrot.lane.b32.xlu0 %v49, 84
  %v252 = vpop.permute.xlu0 %251
  %253 = vrot.lane.b32.xlu0 %v50, 84
  %v254 = vpop.permute.xlu0 %253
  %255 = vrot.lane.b32.xlu0 %v51, 84
  %v256 = vpop.permute.xlu0 %255
  %257 = vrot.lane.b32.xlu0 %v52, 84
  %v258 = vpop.permute.xlu0 %257
  %259 = vrot.lane.b32.xlu0 %v53, 84
  %v260 = vpop.permute.xlu0 %259
  %261 = vrot.lane.b32.xlu0 %v54, 84
  %v262 = vpop.permute.xlu0 %261
  %263 = vrot.lane.b32.xlu0 %v55, 84
  %v264 = vpop.permute.xlu0 %263
  %265 = vrot.lane.b32.xlu0 %v56, 84
  %v266 = vpop.permute.xlu0 %265
  %267 = vrot.lane.b32.xlu0 %v57, 84
  %v268 = vpop.permute.xlu0 %267
  %269 = vrot.lane.b32.xlu0 %v58, 84
  %v270 = vpop.permute.xlu0 %269
  %271 = vrot.lane.b32.xlu0 %v59, 84
  %v272 = vpop.permute.xlu0 %271
  %273 = vrot.lane.b32.xlu0 %v60, 84
  %v274 = vpop.permute.xlu0 %273
  %275 = vrot.lane.b32.xlu0 %v61, 84
  %v276 = vpop.permute.xlu0 %275
  %277 = vrot.lane.b32.xlu0 %v62, 84
  %v278 = vpop.permute.xlu0 %277
  %279 = vrot.lane.b32.xlu0 %v63, 84
  %v280 = vpop.permute.xlu0 %279
  %281 = vrot.lane.b32.xlu0 %v64, 84
  %v282 = vpop.permute.xlu0 %281
  %283 = vrot.lane.b32.xlu0 %v65, 84
  %v284 = vpop.permute.xlu0 %283
  %310 = vrot.lane.b32.xlu0 %v43, 112
  %v311 = vpop.permute.xlu0 %310
  %312 = vrot.lane.b32.xlu0 %v44, 112
  %v313 = vpop.permute.xlu0 %312
  %314 = vrot.lane.b32.xlu0 %v45, 112
  %v315 = vpop.permute.xlu0 %314
  %316 = vrot.lane.b32.xlu0 %v46, 112
  %v317 = vpop.permute.xlu0 %316
  %318 = vrot.lane.b32.xlu0 %v47, 112
  %v319 = vpop.permute.xlu0 %318
  %320 = vrot.lane.b32.xlu0 %v48, 112
  %v321 = vpop.permute.xlu0 %320
  %322 = vrot.lane.b32.xlu0 %v49, 112
  %v323 = vpop.permute.xlu0 %322
  %324 = vrot.lane.b32.xlu0 %v50, 112
  %v325 = vpop.permute.xlu0 %324
  %326 = vrot.lane.b32.xlu0 %v51, 112
  %v327 = vpop.permute.xlu0 %326
  %328 = vrot.lane.b32.xlu0 %v52, 112
  %v329 = vpop.permute.xlu0 %328
  %330 = vrot.lane.b32.xlu0 %v53, 112
  %v331 = vpop.permute.xlu0 %330
  %332 = vrot.lane.b32.xlu0 %v54, 112
  %v333 = vpop.permute.xlu0 %332
  %334 = vrot.lane.b32.xlu0 %v55, 112
  %v335 = vpop.permute.xlu0 %334
  %336 = vrot.lane.b32.xlu0 %v56, 112
  %v337 = vpop.permute.xlu0 %336
  %338 = vrot.lane.b32.xlu0 %v57, 112
  %v339 = vpop.permute.xlu0 %338
  %340 = vrot.lane.b32.xlu0 %v58, 112
  %v341 = vpop.permute.xlu0 %340
  %342 = vrot.lane.b32.xlu0 %v59, 112
  %v343 = vpop.permute.xlu0 %342
  %344 = vrot.lane.b32.xlu0 %v60, 112
  %v345 = vpop.permute.xlu0 %344
  %346 = vrot.lane.b32.xlu0 %v61, 112
  %v347 = vpop.permute.xlu0 %346
  %348 = vrot.lane.b32.xlu0 %v62, 112
  %v349 = vpop.permute.xlu0 %348
  %350 = vrot.lane.b32.xlu0 %v63, 112
  %v351 = vpop.permute.xlu0 %350
  %352 = vrot.lane.b32.xlu0 %v64, 112
  %v353 = vpop.permute.xlu0 %352
  %354 = vrot.lane.b32.xlu0 %v65, 112
  %v355 = vpop.permute.xlu0 %354
  %356 = vrot.lane.b32.xlu0 %v66, 112
  %v357 = vpop.permute.xlu0 %356
  %vm382 = vcmask 228352
  %v383 = vsel %vm382, %v39, %v92
  %v384 = vsel %vm382, %v40, %v94
  %v385 = vsel %vm382, %v41, %v96
  %v386 = vsel %vm382, %v42, %v98
  %v387 = vsel %vm382, %v43, %v100
  %v388 = vsel %vm382, %v44, %v102
  %v389 = vsel %vm382, %v45, %v104
  %v390 = vsel %vm382, %v46, %v106
  %v391 = vsel %vm382, %v47, %v108
  %v392 = vsel %vm382, %v48, %v110
  %v393 = vsel %vm382, %v49, %v112
  %v394 = vsel %vm382, %v50, %v114
  %v395 = vsel %vm382, %v51, %v116
  %v396 = vsel %vm382, %v52, %v118
  %v397 = vsel %vm382, %v53, %v120
  %v398 = vsel %vm382, %v54, %v122
  %v399 = vsel %vm382, %v55, %v124
  %v400 = vsel %vm382, %v56, %v126
  %v401 = vsel %vm382, %v57, %v128
  %v402 = vsel %vm382, %v58, %v130
  %v403 = vsel %vm382, %v59, %v132
  %v404 = vsel %vm382, %v60, %v134
  %v405 = vsel %vm382, %v61, %v136
  %v406 = vsel %vm382, %v62, %v138
  %vm407 = vcmask 457728
  %v408 = vsel %vm407, %v383, %v165
  %v409 = vsel %vm407, %v384, %v167
  %v410 = vsel %vm407, %v385, %v169
  %v411 = vsel %vm407, %v386, %v171
  %v412 = vsel %vm407, %v387, %v173
  %v413 = vsel %vm407, %v388, %v175
  %v414 = vsel %vm407, %v389, %v177
  %v415 = vsel %vm407, %v390, %v179
  %v416 = vsel %vm407, %v391, %v181
  %v417 = vsel %vm407, %v392, %v183
  %v418 = vsel %vm407, %v393, %v185
  %v419 = vsel %vm407, %v394, %v187
  %v420 = vsel %vm407, %v395, %v189
  %v421 = vsel %vm407, %v396, %v191
  %v422 = vsel %vm407, %v397, %v193
  %v423 = vsel %vm407, %v398, %v195
  %v424 = vsel %vm407, %v399, %v197
  %v425 = vsel %vm407, %v400, %v199
  %v426 = vsel %vm407, %v401, %v201
  %v427 = vsel %vm407, %v402, %v203
  %v428 = vsel %vm407, %v403, %v205
  %v429 = vsel %vm407, %v404, %v207
  %v430 = vsel %vm407, %v405, %v209
  %v431 = vsel %vm407, %v406, %v211
  %vm432 = vcmask 687104
  %v433 = vsel %vm432, %v408, %v238
  %v434 = vsel %vm432, %v409, %v240
  %v435 = vsel %vm432, %v410, %v242
  %v436 = vsel %vm432, %v411, %v244
  %v437 = vsel %vm432, %v412, %v246
  %v438 = vsel %vm432, %v413, %v248
  %v439 = vsel %vm432, %v414, %v250
  %v440 = vsel %vm432, %v415, %v252
  %v441 = vsel %vm432, %v416, %v254
  %v442 = vsel %vm432, %v417, %v256
  %v443 = vsel %vm432, %v418, %v258
  %v444 = vsel %vm432, %v419, %v260
  %v445 = vsel %vm432, %v420, %v262
  %v446 = vsel %vm432, %v421, %v264
  %v447 = vsel %vm432, %v422, %v266
  %v448 = vsel %vm432, %v423, %v268
  %v449 = vsel %vm432, %v424, %v270
  %v450 = vsel %vm432, %v425, %v272
  %v451 = vsel %vm432, %v426, %v274
  %v452 = vsel %vm432, %v427, %v276
  %v453 = vsel %vm432, %v428, %v278
  %v454 = vsel %vm432, %v429, %v280
  %v455 = vsel %vm432, %v430, %v282
  %v456 = vsel %vm432, %v431, %v284
  %vm457 = vcmask 916480
  %v458 = vsel %vm457, %v433, %v311
  %v459 = vsel %vm457, %v434, %v313
  %v460 = vsel %vm457, %v435, %v315
  %v461 = vsel %vm457, %v436, %v317
  %v462 = vsel %vm457, %v437, %v319
  %v463 = vsel %vm457, %v438, %v321
  %v464 = vsel %vm457, %v439, %v323
  %v465 = vsel %vm457, %v440, %v325
  %v466 = vsel %vm457, %v441, %v327
  %v467 = vsel %vm457, %v442, %v329
  %v468 = vsel %vm457, %v443, %v331
  %v469 = vsel %vm457, %v444, %v333
  %v470 = vsel %vm457, %v445, %v335
  %v471 = vsel %vm457, %v446, %v337
  %v472 = vsel %vm457, %v447, %v339
  %v473 = vsel %vm457, %v448, %v341
  %v474 = vsel %vm457, %v449, %v343
  %v475 = vsel %vm457, %v450, %v345
  %v476 = vsel %vm457, %v451, %v347
  %v477 = vsel %vm457, %v452, %v349
  %v478 = vsel %vm457, %v453, %v351
  %v479 = vsel %vm457, %v454, %v353
  %v480 = vsel %vm457, %v455, %v355
  %v481 = vsel %vm457, %v456, %v357
  %v482 = vpack.c.bf16 %v459, %v458
  %v483 = vpack.c.bf16 %v313, %v311
  %v484 = vpack.c.bf16 %v461, %v460
  %v485 = vpack.c.bf16 %v317, %v315
  %v486 = vpack.c.bf16 %v463, %v462
  %v487 = vpack.c.bf16 %v321, %v319
  %v488 = vpack.c.bf16 %v465, %v464
  %v489 = vpack.c.bf16 %v325, %v323
  %v490 = vpack.c.bf16 %v467, %v466
  %v491 = vpack.c.bf16 %v329, %v327
  %v492 = vpack.c.bf16 %v469, %v468
  %v493 = vpack.c.bf16 %v333, %v331
  %v494 = vpack.c.bf16 %v471, %v470
  %v495 = vpack.c.bf16 %v337, %v335
  %v496 = vpack.c.bf16 %v473, %v472
  %v497 = vpack.c.bf16 %v341, %v339
  %v498 = vpack.c.bf16 %v475, %v474
  %v499 = vpack.c.bf16 %v345, %v343
  %v500 = vpack.c.bf16 %v477, %v476
  %v501 = vpack.c.bf16 %v349, %v347
  %v502 = vpack.c.bf16 %v479, %v478
  %v503 = vpack.c.bf16 %v353, %v351
  %v504 = vpack.c.bf16 %v481, %v480
  %v505 = vpack.c.bf16 %v357, %v355
  %v506 = vld [vmem:[%s1] sm:$0xff]
  %v507 = vld [vmem:[%s1 + $0x8] sm:$0xff]
  %v508 = vld [vmem:[%s1 + $0x10] sm:$0xff]
  %v509 = vld [vmem:[%s1 + $0x18] sm:$0xff]
  %v510 = vld [vmem:[%s1 + $0x20] sm:$0xff]
  %v511 = vld [vmem:[%s1 + $0x28] sm:$0xff]
  %v512 = vld [vmem:[%s1 + $0x30] sm:$0xff]
  %v513 = vld [vmem:[%s1 + $0x38] sm:$0xff]
  %v514 = vld [vmem:[%s1 + $0x40] sm:$0xff]
  %v515 = vld [vmem:[%s1 + $0x48] sm:$0xff]
  %v516 = vld [vmem:[%s1 + $0x50] sm:$0xff]
  %v517 = vld [vmem:[%s1 + $0x58] sm:$0xff]
  %v518 = vld [vmem:[%s1 + $0x60] sm:$0xff]
  %v519 = vld [vmem:[%s1 + $0x68] sm:$0xff]
  %v520 = vld [vmem:[%s1 + $0x70] sm:$0xff]
  %v521 = vld [vmem:[%s1 + $0x78] sm:$0xff]
  %v522 = vld [vmem:[%s1 + $0x80] sm:$0xff]
  %v523 = vld [vmem:[%s1 + $0x88] sm:$0x33]
  %v524 = vld [vmem:[%s2] sm:$0x3]
  %v526 = vlaneseq
  %v527 = vshrl.u32 %v526, 7
  %v528 = vsub.s32 0, %v527
  %v529 = vrot.slane %v524, %v528
  %v530 = vlaneseq
  %v531 = vshrl.u32 %v530, 7
  %v532 = vsub.s32 1, %v531
  %v533 = vrot.slane %v524, %v532
  %v554 = vunpack.c.l.b16 %v506
  %v555 = vunpack.c.h.b16 %v506
  %v556 = vunpack.c.l.b16 %v507
  %v557 = vunpack.c.h.b16 %v507
  %v558 = vunpack.c.l.b16 %v508
  %v559 = vunpack.c.h.b16 %v508
  %v560 = vunpack.c.l.b16 %v509
  %v561 = vunpack.c.h.b16 %v509
  %v562 = vunpack.c.l.b16 %v510
  %v563 = vunpack.c.h.b16 %v510
  %v564 = vunpack.c.l.b16 %v511
  %v565 = vunpack.c.h.b16 %v511
  %v566 = vunpack.c.l.b16 %v512
  %v567 = vunpack.c.h.b16 %v512
  %v568 = vunpack.c.l.b16 %v513
  %v569 = vunpack.c.h.b16 %v513
  %v570 = vunpack.c.l.b16 %v514
  %v571 = vunpack.c.h.b16 %v514
  %v572 = vunpack.c.l.b16 %v515
  %v573 = vunpack.c.h.b16 %v515
  %v574 = vunpack.c.l.b16 %v516
  %v575 = vunpack.c.h.b16 %v516
  %v576 = vunpack.c.l.b16 %v517
  %v577 = vunpack.c.h.b16 %v517
  %v578 = vunpack.c.l.b16 %v518
  %v579 = vunpack.c.h.b16 %v518
  %v580 = vunpack.c.l.b16 %v519
  %v581 = vunpack.c.h.b16 %v519
  %v582 = vunpack.c.l.b16 %v520
  %v583 = vunpack.c.h.b16 %v520
  %v584 = vunpack.c.l.b16 %v521
  %v585 = vunpack.c.h.b16 %v521
  %v586 = vunpack.c.l.b16 %v522
  %v587 = vunpack.c.h.b16 %v522
  %v588 = vunpack.c.l.b16 %v523
  %v589 = vunpack.c.h.b16 %v523
  %v590 = vpack.c.b16 %v556, %v554
  %v591 = vpack.c.b16 %v557, %v555
  %v592 = vpack.c.b16 %v560, %v558
  %v593 = vpack.c.b16 %v561, %v559
  %v594 = vpack.c.b16 %v564, %v562
  %v595 = vpack.c.b16 %v565, %v563
  %v596 = vpack.c.b16 %v568, %v566
  %v597 = vpack.c.b16 %v569, %v567
  %v598 = vpack.c.b16 %v572, %v570
  %v599 = vpack.c.b16 %v573, %v571
  %v600 = vpack.c.b16 %v576, %v574
  %v601 = vpack.c.b16 %v577, %v575
  %v602 = vpack.c.b16 %v580, %v578
  %v603 = vpack.c.b16 %v581, %v579
  %v604 = vpack.c.b16 %v584, %v582
  %v605 = vpack.c.b16 %v585, %v583
  %v606 = vpack.c.b16 %v588, %v586
  %v607 = vpack.c.b16 %v589, %v587
  %vm624 = vcmask 97280
  %v626 = vsel %vm624, %v483, 0
  %v629 = vsel %vm624, %v485, 0
  %v632 = vsel %vm624, %v487, 0
  %v635 = vsel %vm624, %v489, 0
  %v638 = vsel %vm624, %v491, 0
  %v641 = vsel %vm624, %v493, 0
  %v644 = vsel %vm624, %v495, 0
  %v647 = vsel %vm624, %v497, 0
  %v650 = vsel %vm624, %v499, 0
  %v653 = vsel %vm624, %v501, 0
  %v656 = vsel %vm624, %v503, 0
  %v659 = vsel %vm624, %v505, 0
  %vm661 = vcmask 1045504
  %v663 = vsel %vm661, %v606, 0
  %v666 = vsel %vm661, %v607, 0
  %668 = vmatprep.subr.bf16.mxu0 %v591
  %669 = vmatpush1.bf16.msra.mxu0 %v590
  %670 = vmatprep.subr.bf16.mxu0 %v593
  %671 = vmatpush1.bf16.msra.mxu0 %v592
  %672 = vmatprep.subr.bf16.mxu0 %v595
  %673 = vmatpush1.bf16.msra.mxu0 %v594
  %674 = vmatprep.subr.bf16.mxu0 %v597
  %675 = vmatpush1.bf16.msra.mxu0 %v596
  %676 = vmatprep.subr.bf16.mxu0 %v599
  %677 = vmatpush1.bf16.msra.mxu0 %v598
  %678 = vmatprep.subr.bf16.mxu0 %v601
  %679 = vmatpush1.bf16.msra.mxu0 %v600
  %680 = vmatprep.subr.bf16.mxu0 %v603
  %681 = vmatpush1.bf16.msra.mxu0 %v602
  %682 = vmatprep.subr.bf16.mxu0 %v605
  %683 = vmatpush1.bf16.msra.mxu0 %v604
  %684 = vmatprep.subr.bf16.mxu0 %v666
  %685 = vmatpush1.bf16.msra.mxu0 %v663
  %686 = vmatprep.subr.bf16.mxu0 0
  %687 = vmatpush1.bf16.msra.mxu0 0
  %688 = vmatprep.subr.bf16.mxu0 0
  %689 = vmatpush1.bf16.msra.mxu0 0
  %690 = vmatprep.subr.bf16.mxu0 0
  %691 = vmatpush1.bf16.msra.mxu0 0
  %692 = vmatprep.subr.bf16.mxu0 0
  %693 = vmatpush1.bf16.msra.mxu0 0
  %694 = vmatprep.subr.bf16.mxu0 0
  %695 = vmatpush1.bf16.msra.mxu0 0
  %696 = vmatprep.subr.bf16.mxu0 0
  %697 = vmatpush1.bf16.msra.mxu0 0
  %698 = vmatprep.subr.bf16.mxu0 0
  %699 = vmatpush1.bf16.msra.mxu0 0
  %700 = vmatprep.mubr.bf16.mxu0 %v626
  %701 = vmatmul.mubr.bf16.gmra.mrb[0].mxu0 %v482
  %v702 = vpop.f32.mrb[0].mxu0
  %v703 = vadd.f32 %v529, %v702
  %v704 = vpop.f32.mrb[0].mxu0
  %v705 = vadd.f32 %v533, %v704
  %v706 = vpop.f32.mrb[0].mxu0
  %v707 = vadd.f32 %v529, %v706
  %v708 = vpop.f32.mrb[0].mxu0
  %v709 = vadd.f32 %v533, %v708
  %710 = vmatprep.mubr.bf16.mxu0 %v629
  %711 = vmatmul.mubr.bf16.gmra.mrb[0].mxu0 %v484
  %v712 = vpop.f32.mrb[0].mxu0
  %v713 = vadd.f32 %v529, %v712
  %v714 = vpop.f32.mrb[0].mxu0
  %v715 = vadd.f32 %v533, %v714
  %v716 = vpop.f32.mrb[0].mxu0
  %v717 = vadd.f32 %v529, %v716
  %v718 = vpop.f32.mrb[0].mxu0
  %v719 = vadd.f32 %v533, %v718
  %720 = vmatprep.mubr.bf16.mxu0 %v632
  %721 = vmatmul.mubr.bf16.gmra.mrb[0].mxu0 %v486
  %v722 = vpop.f32.mrb[0].mxu0
  %v723 = vadd.f32 %v529, %v722
  %v724 = vpop.f32.mrb[0].mxu0
  %v725 = vadd.f32 %v533, %v724
  %v726 = vpop.f32.mrb[0].mxu0
  %v727 = vadd.f32 %v529, %v726
  %v728 = vpop.f32.mrb[0].mxu0
  %v729 = vadd.f32 %v533, %v728
  %730 = vmatprep.mubr.bf16.mxu0 %v635
  %731 = vmatmul.mubr.bf16.gmra.mrb[0].mxu0 %v488
  %v732 = vpop.f32.mrb[0].mxu0
  %v733 = vadd.f32 %v529, %v732
  %v734 = vpop.f32.mrb[0].mxu0
  %v735 = vadd.f32 %v533, %v734
  %v736 = vpop.f32.mrb[0].mxu0
  %v737 = vadd.f32 %v529, %v736
  %v738 = vpop.f32.mrb[0].mxu0
  %v739 = vadd.f32 %v533, %v738
  %740 = vmatprep.mubr.bf16.mxu0 %v638
  %741 = vmatmul.mubr.bf16.gmra.mrb[0].mxu0 %v490
  %v742 = vpop.f32.mrb[0].mxu0
  %v743 = vadd.f32 %v529, %v742
  %v744 = vpop.f32.mrb[0].mxu0
  %v745 = vadd.f32 %v533, %v744
  %v746 = vpop.f32.mrb[0].mxu0
  %v747 = vadd.f32 %v529, %v746
  %v748 = vpop.f32.mrb[0].mxu0
  %v749 = vadd.f32 %v533, %v748
  %750 = vmatprep.mubr.bf16.mxu0 %v641
  %751 = vmatmul.mubr.bf16.gmra.mrb[0].mxu0 %v492
  %v752 = vpop.f32.mrb[0].mxu0
  %v753 = vadd.f32 %v529, %v752
  %v754 = vpop.f32.mrb[0].mxu0
  %v755 = vadd.f32 %v533, %v754
  %v756 = vpop.f32.mrb[0].mxu0
  %v757 = vadd.f32 %v529, %v756
  %v758 = vpop.f32.mrb[0].mxu0
  %v759 = vadd.f32 %v533, %v758
  %760 = vmatprep.mubr.bf16.mxu0 %v644
  %761 = vmatmul.mubr.bf16.gmra.mrb[0].mxu0 %v494
  %v762 = vpop.f32.mrb[0].mxu0
  %v763 = vadd.f32 %v529, %v762
  %v764 = vpop.f32.mrb[0].mxu0
  %v765 = vadd.f32 %v533, %v764
  %v766 = vpop.f32.mrb[0].mxu0
  %v767 = vadd.f32 %v529, %v766
  %v768 = vpop.f32.mrb[0].mxu0
  %v769 = vadd.f32 %v533, %v768
  %770 = vmatprep.mubr.bf16.mxu0 %v647
  %771 = vmatmul.mubr.bf16.gmra.mrb[0].mxu0 %v496
  %v772 = vpop.f32.mrb[0].mxu0
  %v773 = vadd.f32 %v529, %v772
  %v774 = vpop.f32.mrb[0].mxu0
  %v775 = vadd.f32 %v533, %v774
  %v776 = vpop.f32.mrb[0].mxu0
  %v777 = vadd.f32 %v529, %v776
  %v778 = vpop.f32.mrb[0].mxu0
  %v779 = vadd.f32 %v533, %v778
  %780 = vmatprep.mubr.bf16.mxu0 %v650
  %781 = vmatmul.mubr.bf16.gmra.mrb[0].mxu0 %v498
  %v782 = vpop.f32.mrb[0].mxu0
  %v783 = vadd.f32 %v529, %v782
  %v784 = vpop.f32.mrb[0].mxu0
  %v785 = vadd.f32 %v533, %v784
  %v786 = vpop.f32.mrb[0].mxu0
  %v787 = vadd.f32 %v529, %v786
  %v788 = vpop.f32.mrb[0].mxu0
  %v789 = vadd.f32 %v533, %v788
  %790 = vmatprep.mubr.bf16.mxu0 %v653
  %791 = vmatmul.mubr.bf16.gmra.mrb[0].mxu0 %v500
  %v792 = vpop.f32.mrb[0].mxu0
  %v793 = vadd.f32 %v529, %v792
  %v794 = vpop.f32.mrb[0].mxu0
  %v795 = vadd.f32 %v533, %v794
  %v796 = vpop.f32.mrb[0].mxu0
  %v797 = vadd.f32 %v529, %v796
  %v798 = vpop.f32.mrb[0].mxu0
  %v799 = vadd.f32 %v533, %v798
  %800 = vmatprep.mubr.bf16.mxu0 %v656
  %801 = vmatmul.mubr.bf16.gmra.mrb[0].mxu0 %v502
  %v802 = vpop.f32.mrb[0].mxu0
  %v803 = vadd.f32 %v529, %v802
  %v804 = vpop.f32.mrb[0].mxu0
  %v805 = vadd.f32 %v533, %v804
  %v806 = vpop.f32.mrb[0].mxu0
  %v807 = vadd.f32 %v529, %v806
  %v808 = vpop.f32.mrb[0].mxu0
  %v809 = vadd.f32 %v533, %v808
  %810 = vmatprep.mubr.bf16.mxu0 %v659
  %811 = vmatmul.mubr.bf16.gmra.mrb[0].mxu0 %v504
  %v812 = vpop.f32.mrb[0].mxu0
  %v813 = vadd.f32 %v529, %v812
  %v814 = vpop.f32.mrb[0].mxu0
  %v815 = vadd.f32 %v533, %v814
  %v816 = vpop.f32.mrb[0].mxu0
  %v817 = vadd.f32 %v529, %v816
  %v818 = vpop.f32.mrb[0].mxu0
  %v819 = vadd.f32 %v533, %v818
  %820 = vdwg.mxu0
  %v821 = vmax.f32 %v703, 0.0
  %v822 = vmax.f32 %v705, 0.0
  %v823 = vmax.f32 %v707, 0.0
  %v824 = vmax.f32 %v709, 0.0
  %v825 = vmax.f32 %v713, 0.0
  %v826 = vmax.f32 %v715, 0.0
  %v827 = vmax.f32 %v717, 0.0
  %v828 = vmax.f32 %v719, 0.0
  %v829 = vmax.f32 %v723, 0.0
  %v830 = vmax.f32 %v725, 0.0
  %v831 = vmax.f32 %v727, 0.0
  %v832 = vmax.f32 %v729, 0.0
  %v833 = vmax.f32 %v733, 0.0
  %v834 = vmax.f32 %v735, 0.0
  %v835 = vmax.f32 %v737, 0.0
  %v836 = vmax.f32 %v739, 0.0
  %v837 = vmax.f32 %v743, 0.0
  %v838 = vmax.f32 %v745, 0.0
  %v839 = vmax.f32 %v747, 0.0
  %v840 = vmax.f32 %v749, 0.0
  %v841 = vmax.f32 %v753, 0.0
  %v842 = vmax.f32 %v755, 0.0
  %v843 = vmax.f32 %v757, 0.0
  %v844 = vmax.f32 %v759, 0.0
  %v845 = vmax.f32 %v763, 0.0
  %v846 = vmax.f32 %v765, 0.0
  %v847 = vmax.f32 %v767, 0.0
  %v848 = vmax.f32 %v769, 0.0
  %v849 = vmax.f32 %v773, 0.0
  %v850 = vmax.f32 %v775, 0.0
  %v851 = vmax.f32 %v777, 0.0
  %v852 = vmax.f32 %v779, 0.0
  %v853 = vmax.f32 %v783, 0.0
  %v854 = vmax.f32 %v785, 0.0
  %v855 = vmax.f32 %v787, 0.0
  %v856 = vmax.f32 %v789, 0.0
  %v857 = vmax.f32 %v793, 0.0
  %v858 = vmax.f32 %v795, 0.0
  %v859 = vmax.f32 %v797, 0.0
  %v860 = vmax.f32 %v799, 0.0
  %v861 = vmax.f32 %v803, 0.0
  %v862 = vmax.f32 %v805, 0.0
  %v863 = vmax.f32 %v807, 0.0
  %v864 = vmax.f32 %v809, 0.0
  %v865 = vmax.f32 %v813, 0.0
  %v866 = vmax.f32 %v815, 0.0
  %v867 = vmax.f32 %v817, 0.0
  %v868 = vmax.f32 %v819, 0.0
  %v869 = vmax.f32 %v821, %v823
  %v870 = vmax.f32 %v822, %v824
  %v871 = vmax.f32 %v825, %v827
  %v872 = vmax.f32 %v826, %v828
  %v873 = vmax.f32 %v829, %v831
  %v874 = vmax.f32 %v830, %v832
  %v875 = vmax.f32 %v833, %v835
  %v876 = vmax.f32 %v834, %v836
  %v877 = vmax.f32 %v837, %v839
  %v878 = vmax.f32 %v838, %v840
  %v879 = vmax.f32 %v841, %v843
  %v880 = vmax.f32 %v842, %v844
  %v881 = vmax.f32 %v845, %v847
  %v882 = vmax.f32 %v846, %v848
  %v883 = vmax.f32 %v849, %v851
  %v884 = vmax.f32 %v850, %v852
  %v885 = vmax.f32 %v853, %v855
  %v886 = vmax.f32 %v854, %v856
  %v887 = vmax.f32 %v857, %v859
  %v888 = vmax.f32 %v858, %v860
  %v889 = vmax.f32 %v861, %v863
  %v890 = vmax.f32 %v862, %v864
  %v891 = vmax.f32 %v865, %v867
  %v892 = vmax.f32 %v866, %v868
  %v893 = vmax.f32 %v869, %v870
  %v894 = vmax.f32 %v871, %v872
  %v895 = vmax.f32 %v873, %v874
  %v896 = vmax.f32 %v875, %v876
  %v897 = vmax.f32 %v877, %v878
  %v898 = vmax.f32 %v879, %v880
  %v899 = vmax.f32 %v881, %v882
  %v900 = vmax.f32 %v883, %v884
  %v901 = vmax.f32 %v885, %v886
  %v902 = vmax.f32 %v887, %v888
  %v903 = vmax.f32 %v889, %v890
  %v904 = vmax.f32 %v891, %v892
  %v905 = vpack.c.bf16 %v894, %v893
  %v906 = vpack.c.bf16 %v895, %v894
  %v907 = vpack.c.bf16 %v896, %v895
  %v908 = vpack.c.bf16 %v897, %v896
  %v909 = vpack.c.bf16 %v898, %v897
  %v910 = vpack.c.bf16 %v899, %v898
  %v911 = vpack.c.bf16 %v900, %v899
  %v912 = vpack.c.bf16 %v901, %v900
  %v913 = vpack.c.bf16 %v902, %v901
  %v914 = vpack.c.bf16 %v903, %v902
  %v915 = vpack.c.bf16 %v904, %v903
  %v916 = vld [vmem:[%s3] sm:$0xff]
  %v917 = vld [vmem:[%s3 + $0x8] sm:$0xff]
  %v918 = vld [vmem:[%s3 + $0x10] sm:$0xff]
  %v919 = vld [vmem:[%s3 + $0x18] sm:$0xff]
  %v920 = vld [vmem:[%s3 + $0x20] sm:$0xff]
  %v921 = vld [vmem:[%s3 + $0x28] sm:$0xff]
  %v922 = vld [vmem:[%s3 + $0x30] sm:$0xff]
  %v923 = vld [vmem:[%s3 + $0x38] sm:$0xff]
  %v924 = vld [vmem:[%s3 + $0x40] sm:$0xff]
  %v925 = vld [vmem:[%s3 + $0x48] sm:$0xff]
  %v926 = vld [vmem:[%s3 + $0x50] sm:$0xff]
  %v927 = vld [vmem:[%s3 + $0x58] sm:$0xff]
  %v928 = vld [vmem:[%s3 + $0x60] sm:$0xff]
  %v929 = vld [vmem:[%s3 + $0x68] sm:$0xff]
  %v930 = vld [vmem:[%s3 + $0x70] sm:$0xff]
  %v931 = vld [vmem:[%s3 + $0x78] sm:$0xff]
  %v932 = vld [vmem:[%s3 + $0x80] sm:$0xff]
  %v933 = vld [vmem:[%s3 + $0x88] sm:$0xff]
  %v934 = vld [vmem:[%s3 + $0x90] sm:$0xff]
  %v935 = vld [vmem:[%s3 + $0x98] sm:$0xff]
  %v936 = vld [vmem:[%s3 + $0xa0] sm:$0xff]
  %v937 = vld [vmem:[%s3 + $0xa8] sm:$0xff]
  %v938 = vld [vmem:[%s3 + $0xb0] sm:$0xff]
  %v939 = vld [vmem:[%s3 + $0xb8] sm:$0xff]
  %v940 = vld [vmem:[%s3 + $0xc0] sm:$0xff]
  %v941 = vld [vmem:[%s3 + $0xc8] sm:$0xff]
  %v942 = vld [vmem:[%s3 + $0xd0] sm:$0xff]
  %v943 = vld [vmem:[%s3 + $0xd8] sm:$0xff]
  %v944 = vld [vmem:[%s3 + $0xe0] sm:$0xff]
  %v945 = vld [vmem:[%s3 + $0xe8] sm:$0xff]
  %v946 = vld [vmem:[%s3 + $0xf0] sm:$0xff]
  %v947 = vld [vmem:[%s3 + $0xf8] sm:$0xff]
  %v948 = vld [vmem:[%s3 + $0x100] sm:$0xff]
  %v949 = vld [vmem:[%s3 + $0x108] sm:$0xff]
  %v950 = vld [vmem:[%s3 + $0x110] sm:$0xff]
  %v951 = vld [vmem:[%s3 + $0x118] sm:$0xff]
  %v952 = vld [vmem:[%s3 + $0x120] sm:$0xff]
  %v953 = vld [vmem:[%s3 + $0x128] sm:$0xff]
  %v954 = vld [vmem:[%s3 + $0x130] sm:$0xff]
  %v955 = vld [vmem:[%s3 + $0x138] sm:$0xff]
  %v956 = vld [vmem:[%s3 + $0x140] sm:$0xff]
  %v957 = vld [vmem:[%s3 + $0x148] sm:$0xff]
  %v958 = vld [vmem:[%s3 + $0x150] sm:$0xff]
  %v959 = vld [vmem:[%s3 + $0x158] sm:$0xff]
  %v960 = vld [vmem:[%s3 + $0x160] sm:$0xff]
  %v961 = vld [vmem:[%s3 + $0x168] sm:$0xff]
  %v962 = vld [vmem:[%s3 + $0x170] sm:$0xff]
  %v963 = vld [vmem:[%s3 + $0x178] sm:$0xff]
  %v964 = vld [vmem:[%s3 + $0x180] sm:$0xff]
  %v965 = vld [vmem:[%s3 + $0x188] sm:$0xff]
  %v966 = vld [vmem:[%s3 + $0x190] sm:$0xff]
  %v967 = vld [vmem:[%s3 + $0x198] sm:$0xff]
  %v968 = vld [vmem:[%s3 + $0x1a0] sm:$0xff]
  %v969 = vld [vmem:[%s3 + $0x1a8] sm:$0xff]
  %v970 = vld [vmem:[%s3 + $0x1b0] sm:$0xff]
  %v971 = vld [vmem:[%s3 + $0x1b8] sm:$0xff]
  %v972 = vld [vmem:[%s3 + $0x1c0] sm:$0xff]
  %v973 = vld [vmem:[%s3 + $0x1c8] sm:$0xff]
  %v974 = vld [vmem:[%s3 + $0x1d0] sm:$0xff]
  %v975 = vld [vmem:[%s3 + $0x1d8] sm:$0xff]
  %v976 = vld [vmem:[%s3 + $0x1e0] sm:$0xff]
  %v977 = vld [vmem:[%s3 + $0x1e8] sm:$0xff]
  %v978 = vld [vmem:[%s3 + $0x1f0] sm:$0xff]
  %v979 = vld [vmem:[%s3 + $0x1f8] sm:$0xff]
  %v980 = vld [vmem:[%s3 + $0x200] sm:$0xff]
  %v981 = vld [vmem:[%s3 + $0x208] sm:$0xff]
  %v982 = vld [vmem:[%s3 + $0x210] sm:$0xff]
  %v983 = vld [vmem:[%s3 + $0x218] sm:$0xff]
  %v984 = vld [vmem:[%s3 + $0x220] sm:$0xff]
  %v985 = vld [vmem:[%s3 + $0x228] sm:$0xff]
  %v986 = vld [vmem:[%s3 + $0x230] sm:$0xff]
  %v987 = vld [vmem:[%s3 + $0x238] sm:$0xff]
  %v988 = vld [vmem:[%s3 + $0x240] sm:$0xff]
  %v989 = vld [vmem:[%s3 + $0x248] sm:$0xff]
  %v990 = vld [vmem:[%s3 + $0x250] sm:$0xff]
  %v991 = vld [vmem:[%s3 + $0x258] sm:$0xff]
  %v992 = vld [vmem:[%s3 + $0x260] sm:$0xff]
  %v993 = vld [vmem:[%s3 + $0x268] sm:$0xff]
  %v994 = vld [vmem:[%s3 + $0x270] sm:$0xff]
  %v995 = vld [vmem:[%s3 + $0x278] sm:$0xff]
  %v996 = vld [vmem:[%s4] sm:$0x3]
  %v998 = vlaneseq
  %v999 = vshrl.u32 %v998, 7
  %v1000 = vsub.s32 0, %v999
  %v1001 = vrot.slane %v996, %v1000
  %v1002 = vlaneseq
  %v1003 = vshrl.u32 %v1002, 7
  %v1004 = vsub.s32 1, %v1003
  %v1005 = vrot.slane %v996, %v1004
  %v1088 = vunpack.c.l.b16 %v916
  %v1089 = vunpack.c.h.b16 %v916
  %v1090 = vunpack.c.l.b16 %v917
  %v1091 = vunpack.c.h.b16 %v917
  %v1092 = vunpack.c.l.b16 %v918
  %v1093 = vunpack.c.h.b16 %v918
  %v1094 = vunpack.c.l.b16 %v919
  %v1095 = vunpack.c.h.b16 %v919
  %v1096 = vunpack.c.l.b16 %v920
  %v1097 = vunpack.c.h.b16 %v920
  %v1098 = vunpack.c.l.b16 %v921
  %v1099 = vunpack.c.h.b16 %v921
  %v1100 = vunpack.c.l.b16 %v922
  %v1101 = vunpack.c.h.b16 %v922
  %v1102 = vunpack.c.l.b16 %v923
  %v1103 = vunpack.c.h.b16 %v923
  %v1104 = vunpack.c.l.b16 %v924
  %v1105 = vunpack.c.h.b16 %v924
  %v1106 = vunpack.c.l.b16 %v925
  %v1107 = vunpack.c.h.b16 %v925
  %v1108 = vunpack.c.l.b16 %v926
  %v1109 = vunpack.c.h.b16 %v926
  %v1110 = vunpack.c.l.b16 %v927
  %v1111 = vunpack.c.h.b16 %v927
  %v1112 = vunpack.c.l.b16 %v928
  %v1113 = vunpack.c.h.b16 %v928
  %v1114 = vunpack.c.l.b16 %v929
  %v1115 = vunpack.c.h.b16 %v929
  %v1116 = vunpack.c.l.b16 %v930
  %v1117 = vunpack.c.h.b16 %v930
  %v1118 = vunpack.c.l.b16 %v931
  %v1119 = vunpack.c.h.b16 %v931
  %v1120 = vunpack.c.l.b16 %v932
  %v1121 = vunpack.c.h.b16 %v932
  %v1122 = vunpack.c.l.b16 %v933
  %v1123 = vunpack.c.h.b16 %v933
  %v1124 = vunpack.c.l.b16 %v934
  %v1125 = vunpack.c.h.b16 %v934
  %v1126 = vunpack.c.l.b16 %v935
  %v1127 = vunpack.c.h.b16 %v935
  %v1128 = vunpack.c.l.b16 %v936
  %v1129 = vunpack.c.h.b16 %v936
  %v1130 = vunpack.c.l.b16 %v937
  %v1131 = vunpack.c.h.b16 %v937
  %v1132 = vunpack.c.l.b16 %v938
  %v1133 = vunpack.c.h.b16 %v938
  %v1134 = vunpack.c.l.b16 %v939
  %v1135 = vunpack.c.h.b16 %v939
  %v1136 = vunpack.c.l.b16 %v940
  %v1137 = vunpack.c.h.b16 %v940
  %v1138 = vunpack.c.l.b16 %v941
  %v1139 = vunpack.c.h.b16 %v941
  %v1140 = vunpack.c.l.b16 %v942
  %v1141 = vunpack.c.h.b16 %v942
  %v1142 = vunpack.c.l.b16 %v943
  %v1143 = vunpack.c.h.b16 %v943
  %v1144 = vunpack.c.l.b16 %v944
  %v1145 = vunpack.c.h.b16 %v944
  %v1146 = vunpack.c.l.b16 %v945
  %v1147 = vunpack.c.h.b16 %v945
  %v1148 = vunpack.c.l.b16 %v946
  %v1149 = vunpack.c.h.b16 %v946
  %v1150 = vunpack.c.l.b16 %v947
  %v1151 = vunpack.c.h.b16 %v947
  %v1152 = vunpack.c.l.b16 %v948
  %v1153 = vunpack.c.h.b16 %v948
  %v1154 = vunpack.c.l.b16 %v949
  %v1155 = vunpack.c.h.b16 %v949
  %v1156 = vunpack.c.l.b16 %v950
  %v1157 = vunpack.c.h.b16 %v950
  %v1158 = vunpack.c.l.b16 %v951
  %v1159 = vunpack.c.h.b16 %v951
  %v1160 = vunpack.c.l.b16 %v952
  %v1161 = vunpack.c.h.b16 %v952
  %v1162 = vunpack.c.l.b16 %v953
  %v1163 = vunpack.c.h.b16 %v953
  %v1164 = vunpack.c.l.b16 %v954
  %v1165 = vunpack.c.h.b16 %v954
  %v1166 = vunpack.c.l.b16 %v955
  %v1167 = vunpack.c.h.b16 %v955
  %v1168 = vunpack.c.l.b16 %v956
  %v1169 = vunpack.c.h.b16 %v956
  %v1170 = vunpack.c.l.b16 %v957
  %v1171 = vunpack.c.h.b16 %v957
  %v1172 = vunpack.c.l.b16 %v958
  %v1173 = vunpack.c.h.b16 %v958
  %v1174 = vunpack.c.l.b16 %v959
  %v1175 = vunpack.c.h.b16 %v959
  %v1176 = vunpack.c.l.b16 %v960
  %v1177 = vunpack.c.h.b16 %v960
  %v1178 = vunpack.c.l.b16 %v961
  %v1179 = vunpack.c.h.b16 %v961
  %v1180 = vunpack.c.l.b16 %v962
  %v1181 = vunpack.c.h.b16 %v962
  %v1182 = vunpack.c.l.b16 %v963
  %v1183 = vunpack.c.h.b16 %v963
  %v1184 = vunpack.c.l.b16 %v964
  %v1185 = vunpack.c.h.b16 %v964
  %v1186 = vunpack.c.l.b16 %v965
  %v1187 = vunpack.c.h.b16 %v965
  %v1188 = vunpack.c.l.b16 %v966
  %v1189 = vunpack.c.h.b16 %v966
  %v1190 = vunpack.c.l.b16 %v967
  %v1191 = vunpack.c.h.b16 %v967
  %v1192 = vunpack.c.l.b16 %v968
  %v1193 = vunpack.c.h.b16 %v968
  %v1194 = vunpack.c.l.b16 %v969
  %v1195 = vunpack.c.h.b16 %v969
  %v1196 = vunpack.c.l.b16 %v970
  %v1197 = vunpack.c.h.b16 %v970
  %v1198 = vunpack.c.l.b16 %v971
  %v1199 = vunpack.c.h.b16 %v971
  %v1200 = vunpack.c.l.b16 %v972
  %v1201 = vunpack.c.h.b16 %v972
  %v1202 = vunpack.c.l.b16 %v973
  %v1203 = vunpack.c.h.b16 %v973
  %v1204 = vunpack.c.l.b16 %v974
  %v1205 = vunpack.c.h.b16 %v974
  %v1206 = vunpack.c.l.b16 %v975
  %v1207 = vunpack.c.h.b16 %v975
  %v1208 = vunpack.c.l.b16 %v976
  %v1209 = vunpack.c.h.b16 %v976
  %v1210 = vunpack.c.l.b16 %v977
  %v1211 = vunpack.c.h.b16 %v977
  %v1212 = vunpack.c.l.b16 %v978
  %v1213 = vunpack.c.h.b16 %v978
  %v1214 = vunpack.c.l.b16 %v979
  %v1215 = vunpack.c.h.b16 %v979
  %v1216 = vunpack.c.l.b16 %v980
  %v1217 = vunpack.c.h.b16 %v980
  %v1218 = vunpack.c.l.b16 %v981
  %v1219 = vunpack.c.h.b16 %v981
  %v1220 = vunpack.c.l.b16 %v982
  %v1221 = vunpack.c.h.b16 %v982
  %v1222 = vunpack.c.l.b16 %v983
  %v1223 = vunpack.c.h.b16 %v983
  %v1224 = vunpack.c.l.b16 %v984
  %v1225 = vunpack.c.h.b16 %v984
  %v1226 = vunpack.c.l.b16 %v985
  %v1227 = vunpack.c.h.b16 %v985
  %v1228 = vunpack.c.l.b16 %v986
  %v1229 = vunpack.c.h.b16 %v986
  %v1230 = vunpack.c.l.b16 %v987
  %v1231 = vunpack.c.h.b16 %v987
  %v1232 = vunpack.c.l.b16 %v988
  %v1233 = vunpack.c.h.b16 %v988
  %v1234 = vunpack.c.l.b16 %v989
  %v1235 = vunpack.c.h.b16 %v989
  %v1236 = vunpack.c.l.b16 %v990
  %v1237 = vunpack.c.h.b16 %v990
  %v1238 = vunpack.c.l.b16 %v991
  %v1239 = vunpack.c.h.b16 %v991
  %v1240 = vunpack.c.l.b16 %v992
  %v1241 = vunpack.c.h.b16 %v992
  %v1242 = vunpack.c.l.b16 %v993
  %v1243 = vunpack.c.h.b16 %v993
  %v1244 = vunpack.c.l.b16 %v994
  %v1245 = vunpack.c.h.b16 %v994
  %v1246 = vunpack.c.l.b16 %v995
  %v1247 = vunpack.c.h.b16 %v995
  %v1248 = vpack.c.b16 %v1090, %v1088
  %v1249 = vpack.c.b16 %v1091, %v1089
  %v1250 = vpack.c.b16 %v1094, %v1092
  %v1251 = vpack.c.b16 %v1095, %v1093
  %v1252 = vpack.c.b16 %v1098, %v1096
  %v1253 = vpack.c.b16 %v1099, %v1097
  %v1254 = vpack.c.b16 %v1102, %v1100
  %v1255 = vpack.c.b16 %v1103, %v1101
  %v1256 = vpack.c.b16 %v1106, %v1104
  %v1257 = vpack.c.b16 %v1107, %v1105
  %v1258 = vpack.c.b16 %v1110, %v1108
  %v1259 = vpack.c.b16 %v1111, %v1109
  %v1260 = vpack.c.b16 %v1114, %v1112
  %v1261 = vpack.c.b16 %v1115, %v1113
  %v1262 = vpack.c.b16 %v1118, %v1116
  %v1263 = vpack.c.b16 %v1119, %v1117
  %v1264 = vpack.c.b16 %v1122, %v1120
  %v1265 = vpack.c.b16 %v1123, %v1121
  %v1266 = vpack.c.b16 %v1126, %v1124
  %v1267 = vpack.c.b16 %v1127, %v1125
  %v1268 = vpack.c.b16 %v1130, %v1128
  %v1269 = vpack.c.b16 %v1131, %v1129
  %v1270 = vpack.c.b16 %v1134, %v1132
  %v1271 = vpack.c.b16 %v1135, %v1133
  %v1272 = vpack.c.b16 %v1138, %v1136
  %v1273 = vpack.c.b16 %v1139, %v1137
  %v1274 = vpack.c.b16 %v1142, %v1140
  %v1275 = vpack.c.b16 %v1143, %v1141
  %v1276 = vpack.c.b16 %v1146, %v1144
  %v1277 = vpack.c.b16 %v1147, %v1145
  %v1278 = vpack.c.b16 %v1150, %v1148
  %v1279 = vpack.c.b16 %v1151, %v1149
  %v1280 = vpack.c.b16 %v1154, %v1152
  %v1281 = vpack.c.b16 %v1155, %v1153
  %v1282 = vpack.c.b16 %v1158, %v1156
  %v1283 = vpack.c.b16 %v1159, %v1157
  %v1284 = vpack.c.b16 %v1162, %v1160
  %v1285 = vpack.c.b16 %v1163, %v1161
  %v1286 = vpack.c.b16 %v1166, %v1164
  %v1287 = vpack.c.b16 %v1167, %v1165
  %v1288 = vpack.c.b16 %v1170, %v1168
  %v1289 = vpack.c.b16 %v1171, %v1169
  %v1290 = vpack.c.b16 %v1174, %v1172
  %v1291 = vpack.c.b16 %v1175, %v1173
  %v1292 = vpack.c.b16 %v1178, %v1176
  %v1293 = vpack.c.b16 %v1179, %v1177
  %v1294 = vpack.c.b16 %v1182, %v1180
  %v1295 = vpack.c.b16 %v1183, %v1181
  %v1296 = vpack.c.b16 %v1186, %v1184
  %v1297 = vpack.c.b16 %v1187, %v1185
  %v1298 = vpack.c.b16 %v1190, %v1188
  %v1299 = vpack.c.b16 %v1191, %v1189
  %v1300 = vpack.c.b16 %v1194, %v1192
  %v1301 = vpack.c.b16 %v1195, %v1193
  %v1302 = vpack.c.b16 %v1198, %v1196
  %v1303 = vpack.c.b16 %v1199, %v1197
  %v1304 = vpack.c.b16 %v1202, %v1200
  %v1305 = vpack.c.b16 %v1203, %v1201
  %v1306 = vpack.c.b16 %v1206, %v1204
  %v1307 = vpack.c.b16 %v1207, %v1205
  %v1308 = vpack.c.b16 %v1210, %v1208
  %v1309 = vpack.c.b16 %v1211, %v1209
  %v1310 = vpack.c.b16 %v1214, %v1212
  %v1311 = vpack.c.b16 %v1215, %v1213
  %v1312 = vpack.c.b16 %v1218, %v1216
  %v1313 = vpack.c.b16 %v1219, %v1217
  %v1314 = vpack.c.b16 %v1222, %v1220
  %v1315 = vpack.c.b16 %v1223, %v1221
  %v1316 = vpack.c.b16 %v1226, %v1224
  %v1317 = vpack.c.b16 %v1227, %v1225
  %v1318 = vpack.c.b16 %v1230, %v1228
  %v1319 = vpack.c.b16 %v1231, %v1229
  %v1320 = vpack.c.b16 %v1234, %v1232
  %v1321 = vpack.c.b16 %v1235, %v1233
  %v1322 = vpack.c.b16 %v1238, %v1236
  %v1323 = vpack.c.b16 %v1239, %v1237
  %v1324 = vpack.c.b16 %v1242, %v1240
  %v1325 = vpack.c.b16 %v1243, %v1241
  %v1326 = vpack.c.b16 %v1246, %v1244
  %v1327 = vpack.c.b16 %v1247, %v1245
  %1408 = vmatprep.subr.bf16.mxu0 %v1249
  %1409 = vmatpush1.bf16.msra.mxu0 %v1248
  %1410 = vmatprep.subr.bf16.mxu0 %v1251
  %1411 = vmatpush1.bf16.msra.mxu0 %v1250
  %1412 = vmatprep.subr.bf16.mxu0 %v1253
  %1413 = vmatpush1.bf16.msra.mxu0 %v1252
  %1414 = vmatprep.subr.bf16.mxu0 %v1255
  %1415 = vmatpush1.bf16.msra.mxu0 %v1254
  %1416 = vmatprep.subr.bf16.mxu0 %v1257
  %1417 = vmatpush1.bf16.msra.mxu0 %v1256
  %1418 = vmatprep.subr.bf16.mxu0 %v1259
  %1419 = vmatpush1.bf16.msra.mxu0 %v1258
  %1420 = vmatprep.subr.bf16.mxu0 %v1261
  %1421 = vmatpush1.bf16.msra.mxu0 %v1260
  %1422 = vmatprep.subr.bf16.mxu0 %v1263
  %1423 = vmatpush1.bf16.msra.mxu0 %v1262
  %1424 = vmatprep.subr.bf16.mxu0 %v1265
  %1425 = vmatpush1.bf16.msra.mxu0 %v1264
  %1426 = vmatprep.subr.bf16.mxu0 %v1267
  %1427 = vmatpush1.bf16.msra.mxu0 %v1266
  %1428 = vmatprep.subr.bf16.mxu0 %v1269
  %1429 = vmatpush1.bf16.msra.mxu0 %v1268
  %1430 = vmatprep.subr.bf16.mxu0 %v1271
  %1431 = vmatpush1.bf16.msra.mxu0 %v1270
  %1432 = vmatprep.subr.bf16.mxu0 %v1273
  %1433 = vmatpush1.bf16.msra.mxu0 %v1272
  %1434 = vmatprep.subr.bf16.mxu0 %v1275
  %1435 = vmatpush1.bf16.msra.mxu0 %v1274
  %1436 = vmatprep.subr.bf16.mxu0 %v1277
  %1437 = vmatpush1.bf16.msra.mxu0 %v1276
  %1438 = vmatprep.subr.bf16.mxu0 %v1279
  %1439 = vmatpush1.bf16.msra.mxu0 %v1278
  %1440 = vmatprep.mubr.bf16.mxu0 %v906
  %1441 = vmatmul.mubr.bf16.gmra.mrb[0].mxu0 %v905
  %v1442 = vpop.f32.mrb[0].mxu0
  %v1443 = vadd.f32 %v1001, %v1442
  %v1444 = vpop.f32.mrb[0].mxu0
  %v1445 = vadd.f32 %v1005, %v1444
  %v1446 = vpop.f32.mrb[0].mxu0
  %v1447 = vadd.f32 %v1001, %v1446
  %v1448 = vpop.f32.mrb[0].mxu0
  %v1449 = vadd.f32 %v1005, %v1448
  %1450 = vmatprep.mubr.bf16.mxu0 %v908
  %1451 = vmatmul.mubr.bf16.gmra.mrb[0].mxu0 %v907
  %v1452 = vpop.f32.mrb[0].mxu0
  %v1453 = vadd.f32 %v1001, %v1452
  %v1454 = vpop.f32.mrb[0].mxu0
  %v1455 = vadd.f32 %v1005, %v1454
  %v1456 = vpop.f32.mrb[0].mxu0
  %v1457 = vadd.f32 %v1001, %v1456
  %v1458 = vpop.f32.mrb[0].mxu0
  %v1459 = vadd.f32 %v1005, %v1458
  %1460 = vmatprep.mubr.bf16.mxu0 %v910
  %1461 = vmatmul.mubr.bf16.gmra.mrb[0].mxu0 %v909
  %v1462 = vpop.f32.mrb[0].mxu0
  %v1463 = vadd.f32 %v1001, %v1462
  %v1464 = vpop.f32.mrb[0].mxu0
  %v1465 = vadd.f32 %v1005, %v1464
  %v1466 = vpop.f32.mrb[0].mxu0
  %v1467 = vadd.f32 %v1001, %v1466
  %v1468 = vpop.f32.mrb[0].mxu0
  %v1469 = vadd.f32 %v1005, %v1468
  %1470 = vmatprep.mubr.bf16.mxu0 %v912
  %1471 = vmatmul.mubr.bf16.gmra.mrb[0].mxu0 %v911
  %v1472 = vpop.f32.mrb[0].mxu0
  %v1473 = vadd.f32 %v1001, %v1472
  %v1474 = vpop.f32.mrb[0].mxu0
  %v1475 = vadd.f32 %v1005, %v1474
  %v1476 = vpop.f32.mrb[0].mxu0
  %v1477 = vadd.f32 %v1001, %v1476
  %v1478 = vpop.f32.mrb[0].mxu0
  %v1479 = vadd.f32 %v1005, %v1478
  %1480 = vdwg.mxu0
  %1481 = vmatprep.subr.bf16.mxu0 %v1281
  %1482 = vmatpush1.bf16.msra.mxu0 %v1280
  %1483 = vmatprep.subr.bf16.mxu0 %v1283
  %1484 = vmatpush1.bf16.msra.mxu0 %v1282
  %1485 = vmatprep.subr.bf16.mxu0 %v1285
  %1486 = vmatpush1.bf16.msra.mxu0 %v1284
  %1487 = vmatprep.subr.bf16.mxu0 %v1287
  %1488 = vmatpush1.bf16.msra.mxu0 %v1286
  %1489 = vmatprep.subr.bf16.mxu0 %v1289
  %1490 = vmatpush1.bf16.msra.mxu0 %v1288
  %1491 = vmatprep.subr.bf16.mxu0 %v1291
  %1492 = vmatpush1.bf16.msra.mxu0 %v1290
  %1493 = vmatprep.subr.bf16.mxu0 %v1293
  %1494 = vmatpush1.bf16.msra.mxu0 %v1292
  %1495 = vmatprep.subr.bf16.mxu0 %v1295
  %1496 = vmatpush1.bf16.msra.mxu0 %v1294
  %1497 = vmatprep.subr.bf16.mxu0 %v1297
  %1498 = vmatpush1.bf16.msra.mxu0 %v1296
  %1499 = vmatprep.subr.bf16.mxu0 %v1299
  %1500 = vmatpush1.bf16.msra.mxu0 %v1298
  %1501 = vmatprep.subr.bf16.mxu0 %v1301
  %1502 = vmatpush1.bf16.msra.mxu0 %v1300
  %1503 = vmatprep.subr.bf16.mxu0 %v1303
  %1504 = vmatpush1.bf16.msra.mxu0 %v1302
  %1505 = vmatprep.subr.bf16.mxu0 %v1305
  %1506 = vmatpush1.bf16.msra.mxu0 %v1304
  %1507 = vmatprep.subr.bf16.mxu0 %v1307
  %1508 = vmatpush1.bf16.msra.mxu0 %v1306
  %1509 = vmatprep.subr.bf16.mxu0 %v1309
  %1510 = vmatpush1.bf16.msra.mxu0 %v1308
  %1511 = vmatprep.subr.bf16.mxu0 %v1311
  %1512 = vmatpush1.bf16.msra.mxu0 %v1310
  %1513 = vmatprep.mubr.bf16.mxu0 %v908
  %1514 = vmatmul.mubr.bf16.gmra.mrb[0].mxu0 %v907
  %v1515 = vpop.f32.mrb[0].mxu0
  %v1516 = vadd.f32 %v1443, %v1515
  %v1517 = vpop.f32.mrb[0].mxu0
  %v1518 = vadd.f32 %v1445, %v1517
  %v1519 = vpop.f32.mrb[0].mxu0
  %v1520 = vadd.f32 %v1447, %v1519
  %v1521 = vpop.f32.mrb[0].mxu0
  %v1522 = vadd.f32 %v1449, %v1521
  %1523 = vmatprep.mubr.bf16.mxu0 %v910
  %1524 = vmatmul.mubr.bf16.gmra.mrb[0].mxu0 %v909
  %v1525 = vpop.f32.mrb[0].mxu0
  %v1526 = vadd.f32 %v1453, %v1525
  %v1527 = vpop.f32.mrb[0].mxu0
  %v1528 = vadd.f32 %v1455, %v1527
  %v1529 = vpop.f32.mrb[0].mxu0
  %v1530 = vadd.f32 %v1457, %v1529
  %v1531 = vpop.f32.mrb[0].mxu0
  %v1532 = vadd.f32 %v1459, %v1531
  %1533 = vmatprep.mubr.bf16.mxu0 %v912
  %1534 = vmatmul.mubr.bf16.gmra.mrb[0].mxu0 %v911
  %v1535 = vpop.f32.mrb[0].mxu0
  %v1536 = vadd.f32 %v1463, %v1535
  %v1537 = vpop.f32.mrb[0].mxu0
  %v1538 = vadd.f32 %v1465, %v1537
  %v1539 = vpop.f32.mrb[0].mxu0
  %v1540 = vadd.f32 %v1467, %v1539
  %v1541 = vpop.f32.mrb[0].mxu0
  %v1542 = vadd.f32 %v1469, %v1541
  %1543 = vmatprep.mubr.bf16.mxu0 %v914
  %1544 = vmatmul.mubr.bf16.gmra.mrb[0].mxu0 %v913
  %v1545 = vpop.f32.mrb[0].mxu0
  %v1546 = vadd.f32 %v1473, %v1545
  %v1547 = vpop.f32.mrb[0].mxu0
  %v1548 = vadd.f32 %v1475, %v1547
  %v1549 = vpop.f32.mrb[0].mxu0
  %v1550 = vadd.f32 %v1477, %v1549
  %v1551 = vpop.f32.mrb[0].mxu0
  %v1552 = vadd.f32 %v1479, %v1551
  %1553 = vdwg.mxu0
  %1554 = vmatprep.subr.bf16.mxu0 %v1313
  %1555 = vmatpush1.bf16.msra.mxu0 %v1312
  %1556 = vmatprep.subr.bf16.mxu0 %v1315
  %1557 = vmatpush1.bf16.msra.mxu0 %v1314
  %1558 = vmatprep.subr.bf16.mxu0 %v1317
  %1559 = vmatpush1.bf16.msra.mxu0 %v1316
  %1560 = vmatprep.subr.bf16.mxu0 %v1319
  %1561 = vmatpush1.bf16.msra.mxu0 %v1318
  %1562 = vmatprep.subr.bf16.mxu0 %v1321
  %1563 = vmatpush1.bf16.msra.mxu0 %v1320
  %1564 = vmatprep.subr.bf16.mxu0 %v1323
  %1565 = vmatpush1.bf16.msra.mxu0 %v1322
  %1566 = vmatprep.subr.bf16.mxu0 %v1325
  %1567 = vmatpush1.bf16.msra.mxu0 %v1324
  %1568 = vmatprep.subr.bf16.mxu0 %v1327
  %1569 = vmatpush1.bf16.msra.mxu0 %v1326
  %1570 = vmatprep.subr.bf16.mxu0 0
  %1571 = vmatpush1.bf16.msra.mxu0 0
  %1572 = vmatprep.subr.bf16.mxu0 0
  %1573 = vmatpush1.bf16.msra.mxu0 0
  %1574 = vmatprep.subr.bf16.mxu0 0
  %1575 = vmatpush1.bf16.msra.mxu0 0
  %1576 = vmatprep.subr.bf16.mxu0 0
  %1577 = vmatpush1.bf16.msra.mxu0 0
  %1578 = vmatprep.subr.bf16.mxu0 0
  %1579 = vmatpush1.bf16.msra.mxu0 0
  %1580 = vmatprep.subr.bf16.mxu0 0
  %1581 = vmatpush1.bf16.msra.mxu0 0
  %1582 = vmatprep.subr.bf16.mxu0 0
  %1583 = vmatpush1.bf16.msra.mxu0 0
  %1584 = vmatprep.subr.bf16.mxu0 0
  %1585 = vmatpush1.bf16.msra.mxu0 0
  %1586 = vmatprep.mubr.bf16.mxu0 0
  %1587 = vmatmul.mubr.bf16.gmra.mrb[0].mxu0 %v909
  %v1588 = vpop.f32.mrb[0].mxu0
  %v1589 = vadd.f32 %v1516, %v1588
  %v1590 = vpop.f32.mrb[0].mxu0
  %v1591 = vadd.f32 %v1518, %v1590
  %v1592 = vpop.f32.mrb[0].mxu0
  %v1593 = vadd.f32 %v1520, %v1592
  %v1594 = vpop.f32.mrb[0].mxu0
  %v1595 = vadd.f32 %v1522, %v1594
  %1596 = vmatprep.mubr.bf16.mxu0 0
  %1597 = vmatmul.mubr.bf16.gmra.mrb[0].mxu0 %v911
  %v1598 = vpop.f32.mrb[0].mxu0
  %v1599 = vadd.f32 %v1526, %v1598
  %v1600 = vpop.f32.mrb[0].mxu0
  %v1601 = vadd.f32 %v1528, %v1600
  %v1602 = vpop.f32.mrb[0].mxu0
  %v1603 = vadd.f32 %v1530, %v1602
  %v1604 = vpop.f32.mrb[0].mxu0
  %v1605 = vadd.f32 %v1532, %v1604
  %1606 = vmatprep.mubr.bf16.mxu0 0
  %1607 = vmatmul.mubr.bf16.gmra.mrb[0].mxu0 %v913
  %v1608 = vpop.f32.mrb[0].mxu0
  %v1609 = vadd.f32 %v1536, %v1608
  %v1610 = vpop.f32.mrb[0].mxu0
  %v1611 = vadd.f32 %v1538, %v1610
  %v1612 = vpop.f32.mrb[0].mxu0
  %v1613 = vadd.f32 %v1540, %v1612
  %v1614 = vpop.f32.mrb[0].mxu0
  %v1615 = vadd.f32 %v1542, %v1614
  %1616 = vmatprep.mubr.bf16.mxu0 0
  %1617 = vmatmul.mubr.bf16.gmra.mrb[0].mxu0 %v915
  %v1618 = vpop.f32.mrb[0].mxu0
  %v1619 = vadd.f32 %v1546, %v1618
  %v1620 = vpop.f32.mrb[0].mxu0
  %v1621 = vadd.f32 %v1548, %v1620
  %v1622 = vpop.f32.mrb[0].mxu0
  %v1623 = vadd.f32 %v1550, %v1622
  %v1624 = vpop.f32.mrb[0].mxu0
  %v1625 = vadd.f32 %v1552, %v1624
  %1626 = vdwg.mxu0
  %v1627 = vmax.f32 %v1589, 0.0
  %v1628 = vmax.f32 %v1591, 0.0
  %v1629 = vmax.f32 %v1593, 0.0
  %v1630 = vmax.f32 %v1595, 0.0
  %v1631 = vmax.f32 %v1599, 0.0
  %v1632 = vmax.f32 %v1601, 0.0
  %v1633 = vmax.f32 %v1603, 0.0
  %v1634 = vmax.f32 %v1605, 0.0
  %v1635 = vmax.f32 %v1609, 0.0
  %v1636 = vmax.f32 %v1611, 0.0
  %v1637 = vmax.f32 %v1613, 0.0
  %v1638 = vmax.f32 %v1615, 0.0
  %v1639 = vmax.f32 %v1619, 0.0
  %v1640 = vmax.f32 %v1621, 0.0
  %v1641 = vmax.f32 %v1623, 0.0
  %v1642 = vmax.f32 %v1625, 0.0
  %v1643 = vmax.f32 %v1627, %v1629
  %v1644 = vmax.f32 %v1628, %v1630
  %v1645 = vmax.f32 %v1631, %v1633
  %v1646 = vmax.f32 %v1632, %v1634
  %v1647 = vmax.f32 %v1635, %v1637
  %v1648 = vmax.f32 %v1636, %v1638
  %v1649 = vmax.f32 %v1639, %v1641
  %v1650 = vmax.f32 %v1640, %v1642
  %v1651 = vmax.f32 %v1643, %v1644
  %v1652 = vmax.f32 %v1645, %v1646
  %v1653 = vmax.f32 %v1647, %v1648
  %v1654 = vmax.f32 %v1649, %v1650
  %v1655 = vpack.c.bf16 %v1651, %v1651
  %v1656 = vpack.c.bf16 %v1652, %v1652
  %v1657 = vpack.c.bf16 %v1653, %v1653
  %v1658 = vpack.c.bf16 %v1654, %v1654
  %v1659 = vld [vmem:[%s5] sm:$0xf]
  %v1660 = vld [vmem:[%s5 + $0x4] sm:$0xf]
  %v1661 = vld [vmem:[%s5 + $0x8] sm:$0xf]
  %v1662 = vld [vmem:[%s5 + $0xc] sm:$0xf]
  %v1663 = vld [vmem:[%s5 + $0x10] sm:$0xf]
  %v1664 = vld [vmem:[%s5 + $0x14] sm:$0xf]
  %v1665 = vld [vmem:[%s5 + $0x18] sm:$0xf]
  %v1666 = vld [vmem:[%s5 + $0x1c] sm:$0xf]
  %v1667 = vld [vmem:[%s5 + $0x20] sm:$0xf]
  %v1668 = vld [vmem:[%s5 + $0x24] sm:$0xf]
  %v1669 = vld [vmem:[%s5 + $0x28] sm:$0xf]
  %v1670 = vld [vmem:[%s5 + $0x2c] sm:$0xf]
  %v1671 = vld [vmem:[%s5 + $0x30] sm:$0xf]
  %v1672 = vld [vmem:[%s5 + $0x34] sm:$0xf]
  %v1673 = vld [vmem:[%s5 + $0x38] sm:$0xf]
  %v1674 = vld [vmem:[%s5 + $0x3c] sm:$0xf]
  %v1675 = vld [vmem:[%s5 + $0x40] sm:$0xf]
  %v1676 = vld [vmem:[%s5 + $0x44] sm:$0xf]
  %v1677 = vld [vmem:[%s5 + $0x48] sm:$0xf]
  %v1678 = vld [vmem:[%s5 + $0x4c] sm:$0xf]
  %v1679 = vld [vmem:[%s5 + $0x50] sm:$0xf]
  %v1680 = vld [vmem:[%s5 + $0x54] sm:$0xf]
  %v1681 = vld [vmem:[%s5 + $0x58] sm:$0xf]
  %v1682 = vld [vmem:[%s5 + $0x5c] sm:$0xf]
  %v1683 = vld [vmem:[%s5 + $0x60] sm:$0xf]
  %v1684 = vld [vmem:[%s5 + $0x64] sm:$0xf]
  %v1685 = vld [vmem:[%s5 + $0x68] sm:$0xf]
  %v1686 = vld [vmem:[%s5 + $0x6c] sm:$0xf]
  %v1687 = vld [vmem:[%s5 + $0x70] sm:$0xf]
  %v1688 = vld [vmem:[%s5 + $0x74] sm:$0xf]
  %v1689 = vld [vmem:[%s5 + $0x78] sm:$0xf]
  %v1690 = vld [vmem:[%s5 + $0x7c] sm:$0xf]
  %v1691 = vld [vmem:[%s5 + $0x80] sm:$0xf]
  %v1692 = vld [vmem:[%s5 + $0x84] sm:$0xf]
  %v1693 = vld [vmem:[%s5 + $0x88] sm:$0xf]
  %v1694 = vld [vmem:[%s5 + $0x8c] sm:$0xf]
  %v1695 = vld [vmem:[%s5 + $0x90] sm:$0xf]
  %v1696 = vld [vmem:[%s5 + $0x94] sm:$0xf]
  %v1697 = vld [vmem:[%s5 + $0x98] sm:$0xf]
  %v1698 = vld [vmem:[%s5 + $0x9c] sm:$0xf]
  %v1699 = vld [vmem:[%s5 + $0xa0] sm:$0xf]
  %v1700 = vld [vmem:[%s5 + $0xa4] sm:$0xf]
  %v1701 = vld [vmem:[%s5 + $0xa8] sm:$0xf]
  %v1702 = vld [vmem:[%s5 + $0xac] sm:$0xf]
  %v1703 = vld [vmem:[%s5 + $0xb0] sm:$0xf]
  %v1704 = vld [vmem:[%s5 + $0xb4] sm:$0xf]
  %v1705 = vld [vmem:[%s5 + $0xb8] sm:$0xf]
  %v1706 = vld [vmem:[%s5 + $0xbc] sm:$0xf]
  %v1707 = vld [vmem:[%s5 + $0xc0] sm:$0xf]
  %v1708 = vld [vmem:[%s5 + $0xc4] sm:$0xf]
  %v1709 = vld [vmem:[%s5 + $0xc8] sm:$0xf]
  %v1710 = vld [vmem:[%s5 + $0xcc] sm:$0xf]
  %v1711 = vld [vmem:[%s5 + $0xd0] sm:$0xf]
  %v1712 = vld [vmem:[%s5 + $0xd4] sm:$0xf]
  %v1713 = vld [vmem:[%s5 + $0xd8] sm:$0xf]
  %v1714 = vld [vmem:[%s5 + $0xdc] sm:$0xf]
  %v1715 = vld [vmem:[%s5 + $0xe0] sm:$0xf]
  %v1716 = vld [vmem:[%s5 + $0xe4] sm:$0xf]
  %v1717 = vld [vmem:[%s5 + $0xe8] sm:$0xf]
  %v1718 = vld [vmem:[%s5 + $0xec] sm:$0xf]
  %v1719 = vld [vmem:[%s5 + $0xf0] sm:$0xf]
  %v1720 = vld [vmem:[%s5 + $0xf4] sm:$0xf]
  %v1721 = vld [vmem:[%s5 + $0xf8] sm:$0xf]
  %v1722 = vld [vmem:[%s5 + $0xfc] sm:$0xf]
  %v1723 = vld [vmem:[%s6] sm:$0x1]
  %v1725 = vlaneseq
  %v1726 = vshrl.u32 %v1725, 7
  %v1727 = vsub.s32 0, %v1726
  %v1728 = vrot.slane %v1723, %v1727
  %v1794 = vunpack.c.l.b16 %v1659
  %v1795 = vunpack.c.l.b16 %v1660
  %v1796 = vunpack.c.l.b16 %v1661
  %v1797 = vunpack.c.l.b16 %v1662
  %v1798 = vunpack.c.l.b16 %v1663
  %v1799 = vunpack.c.l.b16 %v1664
  %v1800 = vunpack.c.l.b16 %v1665
  %v1801 = vunpack.c.l.b16 %v1666
  %v1802 = vunpack.c.l.b16 %v1667
  %v1803 = vunpack.c.l.b16 %v1668
  %v1804 = vunpack.c.l.b16 %v1669
  %v1805 = vunpack.c.l.b16 %v1670
  %v1806 = vunpack.c.l.b16 %v1671
  %v1807 = vunpack.c.l.b16 %v1672
  %v1808 = vunpack.c.l.b16 %v1673
  %v1809 = vunpack.c.l.b16 %v1674
  %v1810 = vunpack.c.l.b16 %v1675
  %v1811 = vunpack.c.l.b16 %v1676
  %v1812 = vunpack.c.l.b16 %v1677
  %v1813 = vunpack.c.l.b16 %v1678
  %v1814 = vunpack.c.l.b16 %v1679
  %v1815 = vunpack.c.l.b16 %v1680
  %v1816 = vunpack.c.l.b16 %v1681
  %v1817 = vunpack.c.l.b16 %v1682
  %v1818 = vunpack.c.l.b16 %v1683
  %v1819 = vunpack.c.l.b16 %v1684
  %v1820 = vunpack.c.l.b16 %v1685
  %v1821 = vunpack.c.l.b16 %v1686
  %v1822 = vunpack.c.l.b16 %v1687
  %v1823 = vunpack.c.l.b16 %v1688
  %v1824 = vunpack.c.l.b16 %v1689
  %v1825 = vunpack.c.l.b16 %v1690
  %v1826 = vunpack.c.l.b16 %v1691
  %v1827 = vunpack.c.l.b16 %v1692
  %v1828 = vunpack.c.l.b16 %v1693
  %v1829 = vunpack.c.l.b16 %v1694
  %v1830 = vunpack.c.l.b16 %v1695
  %v1831 = vunpack.c.l.b16 %v1696
  %v1832 = vunpack.c.l.b16 %v1697
  %v1833 = vunpack.c.l.b16 %v1698
  %v1834 = vunpack.c.l.b16 %v1699
  %v1835 = vunpack.c.l.b16 %v1700
  %v1836 = vunpack.c.l.b16 %v1701
  %v1837 = vunpack.c.l.b16 %v1702
  %v1838 = vunpack.c.l.b16 %v1703
  %v1839 = vunpack.c.l.b16 %v1704
  %v1840 = vunpack.c.l.b16 %v1705
  %v1841 = vunpack.c.l.b16 %v1706
  %v1842 = vunpack.c.l.b16 %v1707
  %v1843 = vunpack.c.l.b16 %v1708
  %v1844 = vunpack.c.l.b16 %v1709
  %v1845 = vunpack.c.l.b16 %v1710
  %v1846 = vunpack.c.l.b16 %v1711
  %v1847 = vunpack.c.l.b16 %v1712
  %v1848 = vunpack.c.l.b16 %v1713
  %v1849 = vunpack.c.l.b16 %v1714
  %v1850 = vunpack.c.l.b16 %v1715
  %v1851 = vunpack.c.l.b16 %v1716
  %v1852 = vunpack.c.l.b16 %v1717
  %v1853 = vunpack.c.l.b16 %v1718
  %v1854 = vunpack.c.l.b16 %v1719
  %v1855 = vunpack.c.l.b16 %v1720
  %v1856 = vunpack.c.l.b16 %v1721
  %v1857 = vunpack.c.l.b16 %v1722
  %v1858 = vpack.c.b16 %v1795, %v1794
  %v1859 = vpack.c.b16 %v1797, %v1796
  %v1860 = vpack.c.b16 %v1799, %v1798
  %v1861 = vpack.c.b16 %v1801, %v1800
  %v1862 = vpack.c.b16 %v1803, %v1802
  %v1863 = vpack.c.b16 %v1805, %v1804
  %v1864 = vpack.c.b16 %v1807, %v1806
  %v1865 = vpack.c.b16 %v1809, %v1808
  %v1866 = vpack.c.b16 %v1811, %v1810
  %v1867 = vpack.c.b16 %v1813, %v1812
  %v1868 = vpack.c.b16 %v1815, %v1814
  %v1869 = vpack.c.b16 %v1817, %v1816
  %v1870 = vpack.c.b16 %v1819, %v1818
  %v1871 = vpack.c.b16 %v1821, %v1820
  %v1872 = vpack.c.b16 %v1823, %v1822
  %v1873 = vpack.c.b16 %v1825, %v1824
  %v1874 = vpack.c.b16 %v1827, %v1826
  %v1875 = vpack.c.b16 %v1829, %v1828
  %v1876 = vpack.c.b16 %v1831, %v1830
  %v1877 = vpack.c.b16 %v1833, %v1832
  %v1878 = vpack.c.b16 %v1835, %v1834
  %v1879 = vpack.c.b16 %v1837, %v1836
  %v1880 = vpack.c.b16 %v1839, %v1838
  %v1881 = vpack.c.b16 %v1841, %v1840
  %v1882 = vpack.c.b16 %v1843, %v1842
  %v1883 = vpack.c.b16 %v1845, %v1844
  %v1884 = vpack.c.b16 %v1847, %v1846
  %v1885 = vpack.c.b16 %v1849, %v1848
  %v1886 = vpack.c.b16 %v1851, %v1850
  %v1887 = vpack.c.b16 %v1853, %v1852
  %v1888 = vpack.c.b16 %v1855, %v1854
  %v1889 = vpack.c.b16 %v1857, %v1856
  %1922 = vmatprep.subr.bf16.mxu0 0
  %1923 = vmatpush1.bf16.msra.mxu0 %v1858
  %1924 = vmatprep.subr.bf16.mxu0 0
  %1925 = vmatpush1.bf16.msra.mxu0 %v1859
  %1926 = vmatprep.subr.bf16.mxu0 0
  %1927 = vmatpush1.bf16.msra.mxu0 %v1860
  %1928 = vmatprep.subr.bf16.mxu0 0
  %1929 = vmatpush1.bf16.msra.mxu0 %v1861
  %1930 = vmatprep.subr.bf16.mxu0 0
  %1931 = vmatpush1.bf16.msra.mxu0 %v1862
  %1932 = vmatprep.subr.bf16.mxu0 0
  %1933 = vmatpush1.bf16.msra.mxu0 %v1863
  %1934 = vmatprep.subr.bf16.mxu0 0
  %1935 = vmatpush1.bf16.msra.mxu0 %v1864
  %1936 = vmatprep.subr.bf16.mxu0 0
  %1937 = vmatpush1.bf16.msra.mxu0 %v1865
  %1938 = vmatprep.subr.bf16.mxu0 0
  %1939 = vmatpush1.bf16.msra.mxu0 %v1866
  %1940 = vmatprep.subr.bf16.mxu0 0
  %1941 = vmatpush1.bf16.msra.mxu0 %v1867
  %1942 = vmatprep.subr.bf16.mxu0 0
  %1943 = vmatpush1.bf16.msra.mxu0 %v1868
  %1944 = vmatprep.subr.bf16.mxu0 0
  %1945 = vmatpush1.bf16.msra.mxu0 %v1869
  %1946 = vmatprep.subr.bf16.mxu0 0
  %1947 = vmatpush1.bf16.msra.mxu0 %v1870
  %1948 = vmatprep.subr.bf16.mxu0 0
  %1949 = vmatpush1.bf16.msra.mxu0 %v1871
  %1950 = vmatprep.subr.bf16.mxu0 0
  %1951 = vmatpush1.bf16.msra.mxu0 %v1872
  %1952 = vmatprep.subr.bf16.mxu0 0
  %1953 = vmatpush1.bf16.msra.mxu0 %v1873
  %1954 = vmatprep.mubr.bf16.mxu0 %v1656
  %1955 = vmatmul.mubr.bf16.gmra.mrb[0].mxu0 %v1655
  %v1956 = vpop.f32.mrb[0].mxu0
  %v1957 = vadd.f32 %v1728, %v1956
  %v1958 = vpop.f32.mrb[0].mxu0
  %v1959 = vpop.f32.mrb[0].mxu0
  %v1960 = vpop.f32.mrb[0].mxu0
  %1961 = vdwg.mxu0
  %1962 = vmatprep.subr.bf16.mxu0 0
  %1963 = vmatpush1.bf16.msra.mxu0 %v1874
  %1964 = vmatprep.subr.bf16.mxu0 0
  %1965 = vmatpush1.bf16.msra.mxu0 %v1875
  %1966 = vmatprep.subr.bf16.mxu0 0
  %1967 = vmatpush1.bf16.msra.mxu0 %v1876
  %1968 = vmatprep.subr.bf16.mxu0 0
  %1969 = vmatpush1.bf16.msra.mxu0 %v1877
  %1970 = vmatprep.subr.bf16.mxu0 0
  %1971 = vmatpush1.bf16.msra.mxu0 %v1878
  %1972 = vmatprep.subr.bf16.mxu0 0
  %1973 = vmatpush1.bf16.msra.mxu0 %v1879
  %1974 = vmatprep.subr.bf16.mxu0 0
  %1975 = vmatpush1.bf16.msra.mxu0 %v1880
  %1976 = vmatprep.subr.bf16.mxu0 0
  %1977 = vmatpush1.bf16.msra.mxu0 %v1881
  %1978 = vmatprep.subr.bf16.mxu0 0
  %1979 = vmatpush1.bf16.msra.mxu0 %v1882
  %1980 = vmatprep.subr.bf16.mxu0 0
  %1981 = vmatpush1.bf16.msra.mxu0 %v1883
  %1982 = vmatprep.subr.bf16.mxu0 0
  %1983 = vmatpush1.bf16.msra.mxu0 %v1884
  %1984 = vmatprep.subr.bf16.mxu0 0
  %1985 = vmatpush1.bf16.msra.mxu0 %v1885
  %1986 = vmatprep.subr.bf16.mxu0 0
  %1987 = vmatpush1.bf16.msra.mxu0 %v1886
  %1988 = vmatprep.subr.bf16.mxu0 0
  %1989 = vmatpush1.bf16.msra.mxu0 %v1887
  %1990 = vmatprep.subr.bf16.mxu0 0
  %1991 = vmatpush1.bf16.msra.mxu0 %v1888
  %1992 = vmatprep.subr.bf16.mxu0 0
  %1993 = vmatpush1.bf16.msra.mxu0 %v1889
  %1994 = vmatprep.mubr.bf16.mxu0 %v1658
  %1995 = vmatmul.mubr.bf16.gmra.mrb[0].mxu0 %v1657
  %v1996 = vpop.f32.mrb[0].mxu0
  %v1997 = vadd.f32 %v1957, %v1996
  %v1998 = vpop.f32.mrb[0].mxu0
  %v1999 = vpop.f32.mrb[0].mxu0
  %v2000 = vpop.f32.mrb[0].mxu0
  %2001 = vdwg.mxu0
  %v2002 = vmax.f32 %v1997, 0.0
  %v2003 = vpack.c.bf16 %v2002, %v2002
  %v2004 = vld [vmem:[%s7] sm:$0xf]
  %v2005 = vld [vmem:[%s7 + $0x4] sm:$0xf]
  %v2006 = vld [vmem:[%s7 + $0x8] sm:$0xf]
  %v2007 = vld [vmem:[%s7 + $0xc] sm:$0xf]
  %v2008 = vld [vmem:[%s7 + $0x10] sm:$0xf]
  %v2009 = vld [vmem:[%s7 + $0x14] sm:$0xf]
  %v2010 = vld [vmem:[%s7 + $0x18] sm:$0xf]
  %v2011 = vld [vmem:[%s7 + $0x1c] sm:$0xf]
  %v2012 = vld [vmem:[%s7 + $0x20] sm:$0xf]
  %v2013 = vld [vmem:[%s7 + $0x24] sm:$0xf]
  %v2014 = vld [vmem:[%s7 + $0x28] sm:$0xf]
  %v2015 = vld [vmem:[%s7 + $0x2c] sm:$0xf]
  %v2016 = vld [vmem:[%s7 + $0x30] sm:$0xf]
  %v2017 = vld [vmem:[%s7 + $0x34] sm:$0xf]
  %v2018 = vld [vmem:[%s7 + $0x38] sm:$0xf]
  %v2019 = vld [vmem:[%s8] sm:$0x1]
  %v2021 = vlaneseq
  %v2022 = vshrl.u32 %v2021, 7
  %v2023 = vsub.s32 0, %v2022
  %v2024 = vrot.slane %v2019, %v2023
  %v2041 = vunpack.c.l.b16 %v2004
  %v2042 = vunpack.c.l.b16 %v2005
  %v2043 = vunpack.c.l.b16 %v2006
  %v2044 = vunpack.c.l.b16 %v2007
  %v2045 = vunpack.c.l.b16 %v2008
  %v2046 = vunpack.c.l.b16 %v2009
  %v2047 = vunpack.c.l.b16 %v2010
  %v2048 = vunpack.c.l.b16 %v2011
  %v2049 = vunpack.c.l.b16 %v2012
  %v2050 = vunpack.c.l.b16 %v2013
  %v2051 = vunpack.c.l.b16 %v2014
  %v2052 = vunpack.c.l.b16 %v2015
  %v2053 = vunpack.c.l.b16 %v2016
  %v2054 = vunpack.c.l.b16 %v2017
  %v2055 = vunpack.c.l.b16 %v2018
  %v2056 = vpack.c.b16 %v2042, %v2041
  %v2057 = vpack.c.b16 %v2044, %v2043
  %v2058 = vpack.c.b16 %v2046, %v2045
  %v2059 = vpack.c.b16 %v2048, %v2047
  %v2060 = vpack.c.b16 %v2050, %v2049
  %v2061 = vpack.c.b16 %v2052, %v2051
  %v2062 = vpack.c.b16 %v2054, %v2053
  %v2063 = vpack.c.b16 %v2055, %v2055
  %vm2071 = vcmask 982016
  %v2073 = vsel %vm2071, %v2003, 0
  %vm2075 = vcmask 1043456
  %v2077 = vsel %vm2075, %v2063, 0
  %2079 = vmatprep.subr.bf16.mxu0 0
  %2080 = vmatpush1.bf16.msra.mxu0 %v2056
  %2081 = vmatprep.subr.bf16.mxu0 0
  %2082 = vmatpush1.bf16.msra.mxu0 %v2057
  %2083 = vmatprep.subr.bf16.mxu0 0
  %2084 = vmatpush1.bf16.msra.mxu0 %v2058
  %2085 = vmatprep.subr.bf16.mxu0 0
  %2086 = vmatpush1.bf16.msra.mxu0 %v2059
  %2087 = vmatprep.subr.bf16.mxu0 0
  %2088 = vmatpush1.bf16.msra.mxu0 %v2060
  %2089 = vmatprep.subr.bf16.mxu0 0
  %2090 = vmatpush1.bf16.msra.mxu0 %v2061
  %2091 = vmatprep.subr.bf16.mxu0 0
  %2092 = vmatpush1.bf16.msra.mxu0 %v2062
  %2093 = vmatprep.subr.bf16.mxu0 0
  %2094 = vmatpush1.bf16.msra.mxu0 %v2077
  %2095 = vmatprep.subr.bf16.mxu0 0
  %2096 = vmatpush1.bf16.msra.mxu0 0
  %2097 = vmatprep.subr.bf16.mxu0 0
  %2098 = vmatpush1.bf16.msra.mxu0 0
  %2099 = vmatprep.subr.bf16.mxu0 0
  %2100 = vmatpush1.bf16.msra.mxu0 0
  %2101 = vmatprep.subr.bf16.mxu0 0
  %2102 = vmatpush1.bf16.msra.mxu0 0
  %2103 = vmatprep.subr.bf16.mxu0 0
  %2104 = vmatpush1.bf16.msra.mxu0 0
  %2105 = vmatprep.subr.bf16.mxu0 0
  %2106 = vmatpush1.bf16.msra.mxu0 0
  %2107 = vmatprep.subr.bf16.mxu0 0
  %2108 = vmatpush1.bf16.msra.mxu0 0
  %2109 = vmatprep.subr.bf16.mxu0 0
  %2110 = vmatpush1.bf16.msra.mxu0 0
  %2111 = vmatprep.mubr.bf16.mxu0 0
  %2112 = vmatmul.mubr.bf16.gmra.mrb[0].mxu0 %v2073
  %v2113 = vpop.f32.mrb[0].mxu0
  %v2114 = vadd.f32 %v2024, %v2113
  %v2115 = vpop.f32.mrb[0].mxu0
  %v2116 = vpop.f32.mrb[0].mxu0
  %v2117 = vpop.f32.mrb[0].mxu0
  %2118 = vdwg.mxu0
  %v2119 = vmax.f32 %v2114, 0.0
  %v2120 = vpack.c.bf16 %v2119, %v2119
  %v2121 = vld [vmem:[%s9] sm:$0xf]
  %v2122 = vld [vmem:[%s9 + $0x4] sm:$0xf]
  %v2123 = vld [vmem:[%s9 + $0x8] sm:$0xf]
  %v2124 = vld [vmem:[%s9 + $0xc] sm:$0xf]
  %v2125 = vld [vmem:[%s9 + $0x10] sm:$0xf]
  %v2126 = vld [vmem:[%s9 + $0x14] sm:$0xf]
  %v2127 = vld [vmem:[%s9 + $0x18] sm:$0xf]
  %v2128 = vld [vmem:[%s9 + $0x1c] sm:$0xf]
  %v2129 = vld [vmem:[%s9 + $0x20] sm:$0xf]
  %v2130 = vld [vmem:[%s9 + $0x24] sm:$0xf]
  %v2131 = vld [vmem:[%s9 + $0x28] sm:$0x3]
  %v2132 = vld [vmem:[%s10] sm:$0x1]
  %v2134 = vlaneseq
  %v2135 = vshrl.u32 %v2134, 7
  %v2136 = vsub.s32 0, %v2135
  %v2137 = vrot.slane %v2132, %v2136
  %v2150 = vunpack.c.l.b16 %v2121
  %v2151 = vunpack.c.l.b16 %v2122
  %v2152 = vunpack.c.l.b16 %v2123
  %v2153 = vunpack.c.l.b16 %v2124
  %v2154 = vunpack.c.l.b16 %v2125
  %v2155 = vunpack.c.l.b16 %v2126
  %v2156 = vunpack.c.l.b16 %v2127
  %v2157 = vunpack.c.l.b16 %v2128
  %v2158 = vunpack.c.l.b16 %v2129
  %v2159 = vunpack.c.l.b16 %v2130
  %v2160 = vunpack.c.l.b16 %v2131
  %v2161 = vpack.c.b16 %v2151, %v2150
  %v2162 = vpack.c.b16 %v2153, %v2152
  %v2163 = vpack.c.b16 %v2155, %v2154
  %v2164 = vpack.c.b16 %v2157, %v2156
  %v2165 = vpack.c.b16 %v2159, %v2158
  %v2166 = vpack.c.b16 %v2160, %v2160
  %v2173 = vsel %vm432, %v2120, 0
  %vm2175 = vcmask 1041408
  %v2177 = vsel %vm2175, %v2166, 0
  %2179 = vmatprep.subr.bf16.mxu0 0
  %2180 = vmatpush1.bf16.msra.mxu0 %v2161
  %2181 = vmatprep.subr.bf16.mxu0 0
  %2182 = vmatpush1.bf16.msra.mxu0 %v2162
  %2183 = vmatprep.subr.bf16.mxu0 0
  %2184 = vmatpush1.bf16.msra.mxu0 %v2163
  %2185 = vmatprep.subr.bf16.mxu0 0
  %2186 = vmatpush1.bf16.msra.mxu0 %v2164
  %2187 = vmatprep.subr.bf16.mxu0 0
  %2188 = vmatpush1.bf16.msra.mxu0 %v2165
  %2189 = vmatprep.subr.bf16.mxu0 0
  %2190 = vmatpush1.bf16.msra.mxu0 %v2177
  %2191 = vmatprep.subr.bf16.mxu0 0
  %2192 = vmatpush1.bf16.msra.mxu0 0
  %2193 = vmatprep.subr.bf16.mxu0 0
  %2194 = vmatpush1.bf16.msra.mxu0 0
  %2195 = vmatprep.subr.bf16.mxu0 0
  %2196 = vmatpush1.bf16.msra.mxu0 0
  %2197 = vmatprep.subr.bf16.mxu0 0
  %2198 = vmatpush1.bf16.msra.mxu0 0
  %2199 = vmatprep.subr.bf16.mxu0 0
  %2200 = vmatpush1.bf16.msra.mxu0 0
  %2201 = vmatprep.subr.bf16.mxu0 0
  %2202 = vmatpush1.bf16.msra.mxu0 0
  %2203 = vmatprep.subr.bf16.mxu0 0
  %2204 = vmatpush1.bf16.msra.mxu0 0
  %2205 = vmatprep.subr.bf16.mxu0 0
  %2206 = vmatpush1.bf16.msra.mxu0 0
  %2207 = vmatprep.subr.bf16.mxu0 0
  %2208 = vmatpush1.bf16.msra.mxu0 0
  %2209 = vmatprep.subr.bf16.mxu0 0
  %2210 = vmatpush1.bf16.msra.mxu0 0
  %2211 = vmatprep.mubr.bf16.mxu0 0
  %2212 = vmatmul.mubr.bf16.gmra.mrb[0].mxu0 %v2173
  %v2213 = vpop.f32.mrb[0].mxu0
  %v2214 = vadd.f32 %v2137, %v2213
  %v2215 = vpop.f32.mrb[0].mxu0
  %v2216 = vpop.f32.mrb[0].mxu0
  %v2217 = vpop.f32.mrb[0].mxu0
  %2218 = vdwg.mxu0
  %2219 = vst [vmem:[%s11] sm:$0xff] %v2214
  // Predicated region
  $region46: #{net_forward.1} parent=0 // pred_check
    _
  $region47: #{net_forward.1} parent=0 // pred_check_branch
    %2221 = sbr.rel (0) target = $region49
  $region48: #{net_forward.1} parent=0 // pred_region
    _
  $region49: #{net_forward.1} parent=0 // pred_fallthru
    _
  // Predicated region
  $region50: #{net_forward.1} parent=0 // pred_check
    _
  $region51: #{net_forward.1} parent=0 // pred_check_branch
    %2223 = sbr.rel (0) target = $region53
  $region52: #{net_forward.1} parent=0 // pred_region
    _
  $region53: #{net_forward.1} parent=0 // pred_fallthru
    _

</llo_original>
